<compile_context>
chip_gen: v5e
topology: v5e:2x2
jax: 0.10.0
libtpu: 0.0.40
codegen_flags: <defaults>
</compile_context>

<pallas_src>
import functools

import jax
import jax.numpy as jnp
from jax.experimental import pallas as pl
from jax.experimental.pallas import tpu as pltpu


def _club_sample_kernel(zc_ref, perm_ref, zd_ref,
                        w1_ref, b1_ref, w2m_ref, b2m_ref, w2l_ref, b2l_ref,
                        out_ref, acc_ref, *, gather_chunk):
    g = pl.program_id(0)                 # parallel (core-split) axis
    s = pl.program_id(1)                 # arbitrary (accumulation) axis
    steps = pl.num_programs(1)

    tile_b = zc_ref.shape[0]
    B, Zd = zd_ref.shape

    @pl.when(s == 0)
    def _init():
        acc_ref[...] = jnp.zeros_like(acc_ref)
        out_ref[...] = jnp.zeros_like(out_ref)   # safety: never leave out uninitialized

    # ---- fused layer 1 for both heads: [h_mu | h_lv] = ReLU(zc @ [W1_mu|W1_lv] + b1) ----
    zc = zc_ref[...]                                                   # (TB, Zc) bf16
    h = jnp.dot(zc, w1_ref[...], preferred_element_type=jnp.float32) + b1_ref[...]
    h = jnp.maximum(h, 0.0)                                            # (TB, 2H) f32
    h_bf = h.astype(jnp.bfloat16)

    # ---- layer 2: zero-padded (2H, Zd) weights -> no lane slicing of h needed ----
    mu = jnp.dot(h_bf, w2m_ref[...], preferred_element_type=jnp.float32) + b2m_ref[...]
    logvar = jnp.dot(h_bf, w2l_ref[...], preferred_element_type=jnp.float32) + b2l_ref[...]

    # ---- z_d rows of this tile (positive term), sliced from the resident copy ----
    tile_idx = g * steps + s
    row0 = pl.multiple_of(tile_idx * tile_b, 8)
    zd = zd_ref[pl.ds(row0, tile_b), :]                                # (TB, Zd) f32

    # ---- permuted z_d rows (negative term): one-hot @ z_d gather on the MXU ----
    # TODO(synk): for very large B replace this O(B^2) one-hot gather (and its
    # statically unrolled column chunks) with a per-row DMA gather from HBM.
    perm_tile = perm_ref[...]                                          # (TB, 1) int32
    zdp = None
    for c0 in range(0, B, gather_chunk):
        csize = min(gather_chunk, B - c0)
        col = c0 + jax.lax.broadcasted_iota(jnp.int32, (1, csize), 1)  # (1, csize)
        onehot = jnp.where(col == perm_tile, 1.0, 0.0).astype(jnp.bfloat16)  # (TB, csize)
        zd_chunk = zd_ref[pl.ds(c0, csize), :].astype(jnp.bfloat16)    # (csize, Zd)
        part = jnp.dot(onehot, zd_chunk, preferred_element_type=jnp.float32)
        zdp = part if zdp is None else zdp + part                      # (TB, Zd) f32

    # ---- elementwise tail (f32): d = (positive - negative) per element ----
    inv_var = jnp.exp(-logvar)                                         # EUP slot
    d = ((mu - zdp) ** 2 - (mu - zd) ** 2) * inv_var                   # (TB, Zd)
    per_sample = jnp.sum(d, axis=-1, keepdims=True)                    # (TB, 1) lane reduce
    acc_ref[...] += jnp.abs(per_sample)        # abs() before the mean, as in the spec

    @pl.when(s == steps - 1)
    def _finalize():
        part_sum = jnp.sum(acc_ref[...], axis=0, keepdims=True)        # (1, 1)
        out_ref[...] = jnp.broadcast_to(part_sum, out_ref.shape)       # lane-dense (1, 128)


def _pick_tile(n, max_tile=2048):
    """Whole batch if it fits one step, else the largest pow-2 divisor <= max_tile."""
    if n <= max_tile:
        return n
    t = max_tile
    while t >= 8:
        if n % t == 0:
            return t
        t //= 2
    return n   # fallback: single (full) tile


def club_sample_forward(z_c, z_d, params, perm, tile_b=None):
    """Returns (upper_bound/2, 0.0, 0.0) exactly like CLUBSample.forward."""
    B, Zc = z_c.shape
    Zd = z_d.shape[1]
    H = Zc                       # FF hidden dim == zc_dim (per module)

    # Core split (helps v7x's 2 TensorCores; harmless single-core) + batch tiling.
    G = 2 if (B >= 512 and B % 16 == 0) else 1
    Bc = B // G
    if tile_b is None:
        tile_b = _pick_tile(Bc)
    if Bc % tile_b != 0:
        tile_b = Bc
    steps = Bc // tile_b

    f32, bf16 = jnp.float32, jnp.bfloat16

    # Fused layer-1 weights/bias; zero-padded layer-2 weights (matmul inputs in bf16).
    w1 = jnp.concatenate([params["w1_mu"], params["w1_lv"]], axis=1).astype(bf16)   # (Zc, 2H)
    b1 = jnp.concatenate([params["b1_mu"], params["b1_lv"]], axis=1).astype(f32)    # (1, 2H)
    zero_blk = jnp.zeros((H, Zd), f32)
    w2m = jnp.concatenate([params["w2_mu"], zero_blk], axis=0).astype(bf16)         # (2H, Zd)
    w2l = jnp.concatenate([zero_blk, params["w2_lv"]], axis=0).astype(bf16)         # (2H, Zd)
    b2m = params["b2_mu"].astype(f32)                                               # (1, Zd)
    b2l = params["b2_lv"].astype(f32)                                               # (1, Zd)

    perm2d = perm.astype(jnp.int32).reshape(B, 1)

    def tiled(shape):
        return pl.BlockSpec(shape, lambda g, s: (g * steps + s, 0))

    def resident(shape):
        return pl.BlockSpec(shape, lambda g, s: tuple(0 for _ in shape))

    in_specs = [
        tiled((tile_b, Zc)),          # z_c tile (bf16, pipelined)
        tiled((tile_b, 1)),           # perm rows for this tile (int32)
        resident((B, Zd)),            # z_d, resident in VMEM (f32) -> sliced + gathered in-kernel
        resident((Zc, 2 * H)),        # fused W1 (bf16, stays resident)
        resident((1, 2 * H)),         # fused b1
        resident((2 * H, Zd)),        # padded W2_mu
        resident((1, Zd)),            # b2_mu
        resident((2 * H, Zd)),        # padded W2_lv
        resident((1, Zd)),            # b2_lv
    ]

    kernel = functools.partial(_club_sample_kernel, gather_chunk=min(B, 1024))

    flops = (2 * B * Zc * (2 * H)          # fused layer-1 matmul
             + 2 * (2 * B * H * Zd)        # two layer-2 heads (useful K=H; padding excluded)
             + 2 * B * B * Zd              # one-hot permutation-gather matmul
             + 12 * B * Zd)                # elementwise tail
    bytes_accessed = (2 * B * Zc + 4 * B * Zd + 4 * B
                      + 2 * (Zc * 2 * H) + 4 * (2 * H)
                      + 2 * 2 * (2 * H * Zd) + 4 * 2 * Zd
                      + 4 * G * 128)

    partials = pl.pallas_call(
        kernel,
        out_shape=jax.ShapeDtypeStruct((G, 128), jnp.float32),
        grid_spec=pltpu.PrefetchScalarGridSpec(
            num_scalar_prefetch=0,
            grid=(G, steps),
            in_specs=in_specs,
            out_specs=pl.BlockSpec((1, 128), lambda g, s: (g, 0)),
            scratch_shapes=[pltpu.VMEM((tile_b, 1), jnp.float32)],
        ),
        compiler_params=pltpu.CompilerParams(
            dimension_semantics=("parallel", "arbitrary"),
            vmem_limit_bytes=32 * 1024 * 1024,
        ),
        cost_estimate=pl.CostEstimate(
            flops=flops, transcendentals=B * Zd, bytes_accessed=bytes_accessed),
    )(z_c.astype(bf16), perm2d, z_d.astype(f32), w1, b1, w2m, b2m, w2l, b2l)

    upper = jnp.sum(partials[:, 0]) * (0.5 / B)
    return upper, 0.0, 0.0


def make_params(key, zc_dim, zd_dim):
    """Deterministic stand-ins for the two FF networks (p_mu, p_logvar)."""
    H = zc_dim
    ks = jax.random.split(key, 8)
    scale1 = 1.0 / jnp.sqrt(zc_dim)
    scale2 = 1.0 / jnp.sqrt(H)
    return {
        "w1_mu": jax.random.normal(ks[0], (zc_dim, H), jnp.float32) * scale1,
        "b1_mu": jax.random.normal(ks[1], (1, H), jnp.float32) * 0.01,
        "w2_mu": jax.random.normal(ks[2], (H, zd_dim), jnp.float32) * scale2,
        "b2_mu": jax.random.normal(ks[3], (1, zd_dim), jnp.float32) * 0.01,
        "w1_lv": jax.random.normal(ks[4], (zc_dim, H), jnp.float32) * scale1,
        "b1_lv": jax.random.normal(ks[5], (1, H), jnp.float32) * 0.01,
        "w2_lv": jax.random.normal(ks[6], (H, zd_dim), jnp.float32) * scale2,
        "b2_lv": jax.random.normal(ks[7], (1, zd_dim), jnp.float32) * 0.01,
    }


def reference_f32(z_c, z_d, params, perm):
    """Pure-f32 JAX reference of the PyTorch forward (semantic check)."""
    def ff(x, w1, b1, w2, b2):
        return jnp.maximum(x @ w1 + b1, 0.0) @ w2 + b2
    mu = ff(z_c, params["w1_mu"], params["b1_mu"], params["w2_mu"], params["b2_mu"])
    lv = ff(z_c, params["w1_lv"], params["b1_lv"], params["w2_lv"], params["b2_lv"])
    pos = -(mu - z_d) ** 2 / jnp.exp(lv)
    neg = -(mu - z_d[perm]) ** 2 / jnp.exp(lv)
    return jnp.mean(jnp.abs(pos.sum(-1) - neg.sum(-1))) / 2.0


def reference_matched(z_c, z_d, params, perm):
    """JAX reference replicating the kernel's bf16-matmul / f32-tail numerics."""
    bf16, f32 = jnp.bfloat16, jnp.float32
    H = z_c.shape[1]
    zc = z_c.astype(bf16)
    w1 = jnp.concatenate([params["w1_mu"], params["w1_lv"]], axis=1).astype(bf16)
    b1 = jnp.concatenate([params["b1_mu"], params["b1_lv"]], axis=1).astype(f32)
    h = jnp.maximum(jnp.dot(zc, w1, preferred_element_type=f32) + b1, 0.0).astype(bf16)
    mu = jnp.dot(h[:, :H], params["w2_mu"].astype(bf16),
                 preferred_element_type=f32) + params["b2_mu"]
    lv = jnp.dot(h[:, H:], params["w2_lv"].astype(bf16),
                 preferred_element_type=f32) + params["b2_lv"]
    zd = z_d.astype(f32)
    zdp = z_d.astype(bf16).astype(f32)[perm]     # one-hot bf16 gather == bf16-rounded rows
    d = ((mu - zdp) ** 2 - (mu - zd) ** 2) * jnp.exp(-lv)
    return jnp.mean(jnp.abs(jnp.sum(d, axis=-1))) / 2.0


if __name__ == "__main__":
    def run_case(B, zc_dim, zd_dim, tile_b=None):
        key = jax.random.PRNGKey(0)
        k_zc, k_zd, k_perm, k_params = jax.random.split(key, 4)
        z_c = jax.random.normal(k_zc, (B, zc_dim), jnp.float32)
        z_d = jax.random.normal(k_zd, (B, zd_dim), jnp.float32)
        # torch.randperm replaced by a deterministic JAX permutation (glue, not kernel).
        perm = jax.random.permutation(k_perm, B)
        params = make_params(k_params, zc_dim, zd_dim)

        upper, _, _ = club_sample_forward(z_c, z_d, params, perm, tile_b=tile_b)
        upper = jax.block_until_ready(upper)

        ref_m = reference_matched(z_c, z_d, params, perm)   # same numerics as the kernel
        ref_f = reference_f32(z_c, z_d, params, perm)       # pure-f32 semantic reference
        assert jnp.allclose(upper, ref_m, rtol=2e-3, atol=2e-3), (B, tile_b, upper, ref_m)
        assert jnp.allclose(upper, ref_f, rtol=5e-2, atol=5e-2), (B, tile_b, upper, ref_f)

    run_case(256, 32, 32)               # single grid step (tile_b == B, per review)
    run_case(256, 32, 32, tile_b=64)    # multi-step path: (tile_b,1) accumulator exercised
    run_case(512, 32, 32)               # 2-way core split: grid=(2,1), per-core partials

    print("KERNEL_OK")
</pallas_src>

<mosaic_0001>
module attributes {stable_mosaic.version = 11 : i64} {
  func.func @_club_sample_kernel(%arg0: i32, %arg1: i32, %arg2: memref<256x32xbf16, #tpu.memory_space<vmem>>, %arg3: memref<256x1xi32, #tpu.memory_space<vmem>>, %arg4: memref<256x32xf32, #tpu.memory_space<vmem>>, %arg5: memref<32x64xbf16, #tpu.memory_space<vmem>>, %arg6: memref<1x64xf32, #tpu.memory_space<vmem>>, %arg7: memref<64x32xbf16, #tpu.memory_space<vmem>>, %arg8: memref<1x32xf32, #tpu.memory_space<vmem>>, %arg9: memref<64x32xbf16, #tpu.memory_space<vmem>>, %arg10: memref<1x32xf32, #tpu.memory_space<vmem>>, %arg11: memref<1x128xf32, #tpu.memory_space<vmem>>, %arg12: memref<256x1xf32, #tpu.memory_space<vmem>>) attributes {dimension_semantics = [#tpu.dimension_semantics<parallel>, #tpu.dimension_semantics<arbitrary>], iteration_bounds = array<i64: 1, 1>, scalar_prefetch = 0 : i64, scratch_operands = 1 : i64, tpu.core_type = #tpu.core_type<tc>, window_params = [{transform_indices = @transform_0, window_bounds = array<i64: 256, 32>}, {transform_indices = @transform_1, window_bounds = array<i64: 256, 1>}, {pipeline_mode = #tpu.pipeline_mode<synchronous>, transform_indices = @transform_2, window_bounds = array<i64: 256, 32>}, {pipeline_mode = #tpu.pipeline_mode<synchronous>, transform_indices = @transform_3, window_bounds = array<i64: 32, 64>}, {pipeline_mode = #tpu.pipeline_mode<synchronous>, transform_indices = @transform_4, window_bounds = array<i64: 1, 64>}, {pipeline_mode = #tpu.pipeline_mode<synchronous>, transform_indices = @transform_5, window_bounds = array<i64: 64, 32>}, {pipeline_mode = #tpu.pipeline_mode<synchronous>, transform_indices = @transform_6, window_bounds = array<i64: 1, 32>}, {pipeline_mode = #tpu.pipeline_mode<synchronous>, transform_indices = @transform_7, window_bounds = array<i64: 64, 32>}, {pipeline_mode = #tpu.pipeline_mode<synchronous>, transform_indices = @transform_8, window_bounds = array<i64: 1, 32>}, {transform_indices = @transform_9, window_bounds = array<i64: 1, 128>}]} {
    %c0_i32 = arith.constant 0 : i32
    %0 = arith.cmpi eq, %arg1, %c0_i32 : i32
    %1 = arith.extui %0 : i1 to i32
    %c0_i32_0 = arith.constant 0 : i32
    %2 = arith.cmpi ne, %1, %c0_i32_0 : i32
    scf.if %2 {
      %cst_34 = arith.constant 0.000000e+00 : f32
      %60 = vector.broadcast %cst_34 : f32 to vector<256x1xf32>
      %c0_35 = arith.constant 0 : index
      %c0_36 = arith.constant 0 : index
      %61 = vector.load %arg12[%c0_35, %c0_36] : memref<256x1xf32, #tpu.memory_space<vmem>>, vector<256x1xf32>
      tpu.vector_store %arg12[%c0_35, %c0_36], %60 {strides = array<i32>} : memref<256x1xf32, #tpu.memory_space<vmem>>, vector<256x1xf32>,
      %cst_37 = arith.constant 0.000000e+00 : f32
      %62 = vector.broadcast %cst_37 : f32 to vector<1x128xf32>
      %c0_38 = arith.constant 0 : index
      %c0_39 = arith.constant 0 : index
      %63 = vector.load %arg11[%c0_38, %c0_39] : memref<1x128xf32, #tpu.memory_space<vmem>>, vector<1x128xf32>
      tpu.vector_store %arg11[%c0_38, %c0_39], %62 {strides = array<i32>} : memref<1x128xf32, #tpu.memory_space<vmem>>, vector<1x128xf32>,
    } else {
    }
    %c0 = arith.constant 0 : index
    %c0_1 = arith.constant 0 : index
    %3 = vector.load %arg2[%c0, %c0_1] : memref<256x32xbf16, #tpu.memory_space<vmem>>, vector<256x32xbf16>
    %c0_2 = arith.constant 0 : index
    %c0_3 = arith.constant 0 : index
    %4 = vector.load %arg5[%c0_2, %c0_3] : memref<32x64xbf16, #tpu.memory_space<vmem>>, vector<32x64xbf16>
    %cst = arith.constant dense<0.000000e+00> : vector<256x64xf32>
    %5 = tpu.matmul %3, %4, %cst {dimension_numbers = #tpu.dot_dimension_numbers<[1], [0], [0], [1], [0, 0, 1, 1], [], []>} : vector<256x32xbf16>, vector<32x64xbf16>, vector<256x64xf32> -> vector<256x64xf32>
    %c0_4 = arith.constant 0 : index
    %c0_5 = arith.constant 0 : index
    %6 = vector.load %arg6[%c0_4, %c0_5] : memref<1x64xf32, #tpu.memory_space<vmem>>, vector<1x64xf32>
    %7 = vector.broadcast %6 : vector<1x64xf32> to vector<256x64xf32>
    %8 = arith.addf %5, %7 : vector<256x64xf32>
    %cst_6 = arith.constant 0.000000e+00 : f32
    %9 = vector.broadcast %cst_6 : f32 to vector<256x64xf32>
    %10 = arith.maximumf %8, %9 : vector<256x64xf32>
    %11 = arith.truncf %10 : vector<256x64xf32> to vector<256x64xbf16>
    %c0_7 = arith.constant 0 : index
    %c0_8 = arith.constant 0 : index
    %12 = vector.load %arg7[%c0_7, %c0_8] : memref<64x32xbf16, #tpu.memory_space<vmem>>, vector<64x32xbf16>
    %cst_9 = arith.constant dense<0.000000e+00> : vector<256x32xf32>
    %13 = tpu.matmul %11, %12, %cst_9 {dimension_numbers = #tpu.dot_dimension_numbers<[1], [0], [0], [1], [0, 0, 1, 1], [], []>} : vector<256x64xbf16>, vector<64x32xbf16>, vector<256x32xf32> -> vector<256x32xf32>
    %c0_10 = arith.constant 0 : index
    %c0_11 = arith.constant 0 : index
    %14 = vector.load %arg8[%c0_10, %c0_11] : memref<1x32xf32, #tpu.memory_space<vmem>>, vector<1x32xf32>
    %15 = vector.broadcast %14 : vector<1x32xf32> to vector<256x32xf32>
    %16 = arith.addf %13, %15 : vector<256x32xf32>
    %c0_12 = arith.constant 0 : index
    %c0_13 = arith.constant 0 : index
    %17 = vector.load %arg9[%c0_12, %c0_13] : memref<64x32xbf16, #tpu.memory_space<vmem>>, vector<64x32xbf16>
    %cst_14 = arith.constant dense<0.000000e+00> : vector<256x32xf32>
    %18 = tpu.matmul %11, %17, %cst_14 {dimension_numbers = #tpu.dot_dimension_numbers<[1], [0], [0], [1], [0, 0, 1, 1], [], []>} : vector<256x64xbf16>, vector<64x32xbf16>, vector<256x32xf32> -> vector<256x32xf32>
    %c0_15 = arith.constant 0 : index
    %c0_16 = arith.constant 0 : index
    %19 = vector.load %arg10[%c0_15, %c0_16] : memref<1x32xf32, #tpu.memory_space<vmem>>, vector<1x32xf32>
    %20 = vector.broadcast %19 : vector<1x32xf32> to vector<256x32xf32>
    %21 = arith.addf %18, %20 : vector<256x32xf32>
    %c1_i32 = arith.constant 1 : i32
    %22 = arith.muli %arg0, %c1_i32 : i32
    %23 = arith.addi %22, %arg1 : i32
    %c256_i32 = arith.constant 256 : i32
    %24 = arith.muli %23, %c256_i32 : i32
    %25 = tpu.assume_multiple %24, 8 : i32
    %26 = arith.index_cast %25 : i32 to index
    %c0_17 = arith.constant 0 : index
    %27 = vector.load %arg4[%26, %c0_17] : memref<256x32xf32, #tpu.memory_space<vmem>>, vector<256x32xf32>
    %c0_18 = arith.constant 0 : index
    %c0_19 = arith.constant 0 : index
    %28 = vector.load %arg3[%c0_18, %c0_19] : memref<256x1xi32, #tpu.memory_space<vmem>>, vector<256x1xi32>
    %29 = tpu.iota {dimensions = array<i32: 1>} : vector<1x256xi32>
    %c0_i32_20 = arith.constant 0 : i32
    %30 = vector.broadcast %c0_i32_20 : i32 to vector<1x256xi32>
    %31 = arith.addi %30, %29 : vector<1x256xi32>
    %32 = vector.broadcast %31 : vector<1x256xi32> to vector<256x256xi32>
    %33 = vector.broadcast %28 : vector<256x1xi32> to vector<256x256xi32>
    %34 = arith.cmpi eq, %32, %33 : vector<256x256xi32>
    %cst_21 = arith.constant 1.000000e+00 : f32
    %cst_22 = arith.constant 0.000000e+00 : f32
    %35 = vector.broadcast %cst_21 : f32 to vector<256x256xf32>
    %36 = vector.broadcast %cst_22 : f32 to vector<256x256xf32>
    %37 = arith.select %34, %35, %36 : vector<256x256xi1>, vector<256x256xf32>
    %38 = arith.truncf %37 : vector<256x256xf32> to vector<256x256xbf16>
    %c0_23 = arith.constant 0 : index
    %c0_24 = arith.constant 0 : index
    %39 = vector.load %arg4[%c0_23, %c0_24] : memref<256x32xf32, #tpu.memory_space<vmem>>, vector<256x32xf32>
    %40 = arith.truncf %39 : vector<256x32xf32> to vector<256x32xbf16>
    %cst_25 = arith.constant dense<0.000000e+00> : vector<256x32xf32>
    %41 = tpu.matmul %38, %40, %cst_25 {dimension_numbers = #tpu.dot_dimension_numbers<[1], [0], [0], [1], [0, 0, 1, 1], [], []>} : vector<256x256xbf16>, vector<256x32xbf16>, vector<256x32xf32> -> vector<256x32xf32>
    %cst_26 = arith.constant 0.000000e+00 : f32
    %42 = vector.broadcast %cst_26 : f32 to vector<256x32xf32>
    %43 = arith.subf %42, %21 : vector<256x32xf32>
    %44 = math.exp %43 : vector<256x32xf32>
    %45 = arith.subf %16, %41 : vector<256x32xf32>
    %46 = arith.mulf %45, %45 : vector<256x32xf32>
    %47 = arith.subf %16, %27 : vector<256x32xf32>
    %48 = arith.mulf %47, %47 : vector<256x32xf32>
    %49 = arith.subf %46, %48 : vector<256x32xf32>
    %50 = arith.mulf %49, %44 : vector<256x32xf32>
    %cst_27 = arith.constant dense<0.000000e+00> : vector<256xf32>
    %51 = vector.multi_reduction <add>, %50, %cst_27 [1] : vector<256x32xf32> to vector<256xf32>
    %52 = vector.shape_cast %51 : vector<256xf32> to vector<256x1xf32>
    %c0_28 = arith.constant 0 : index
    %c0_29 = arith.constant 0 : index
    %53 = vector.load %arg12[%c0_28, %c0_29] : memref<256x1xf32, #tpu.memory_space<vmem>>, vector<256x1xf32>
    %54 = math.absf %52 : vector<256x1xf32>
    %55 = arith.addf %53, %54 : vector<256x1xf32>
    %c0_30 = arith.constant 0 : index
    %c0_31 = arith.constant 0 : index
    %56 = vector.load %arg12[%c0_30, %c0_31] : memref<256x1xf32, #tpu.memory_space<vmem>>, vector<256x1xf32>
    tpu.vector_store %arg12[%c0_30, %c0_31], %55 {strides = array<i32>} : memref<256x1xf32, #tpu.memory_space<vmem>>, vector<256x1xf32>,
    %c0_i32_32 = arith.constant 0 : i32
    %57 = arith.cmpi eq, %arg1, %c0_i32_32 : i32
    %58 = arith.extui %57 : i1 to i32
    %c0_i32_33 = arith.constant 0 : i32
    %59 = arith.cmpi ne, %58, %c0_i32_33 : i32
    scf.if %59 {
      %c0_34 = arith.constant 0 : index
      %c0_35 = arith.constant 0 : index
      %60 = vector.load %arg12[%c0_34, %c0_35] : memref<256x1xf32, #tpu.memory_space<vmem>>, vector<256x1xf32>
      %cst_36 = arith.constant dense<0.000000e+00> : vector<1xf32>
      %61 = vector.multi_reduction <add>, %60, %cst_36 [0] : vector<256x1xf32> to vector<1xf32>
      %62 = vector.shape_cast %61 : vector<1xf32> to vector<1x1xf32>
      %63 = vector.shape_cast %62 : vector<1x1xf32> to vector<1x1xf32>
      %64 = vector.broadcast %63 : vector<1x1xf32> to vector<1x128xf32>
      %c0_37 = arith.constant 0 : index
      %c0_38 = arith.constant 0 : index
      %65 = vector.load %arg11[%c0_37, %c0_38] : memref<1x128xf32, #tpu.memory_space<vmem>>, vector<1x128xf32>
      tpu.vector_store %arg11[%c0_37, %c0_38], %64 {strides = array<i32>} : memref<1x128xf32, #tpu.memory_space<vmem>>, vector<1x128xf32>,
    } else {
    }
    return
  }
  func.func @transform_0(%arg0: i32, %arg1: i32) -> (i32, i32) {
    %c1_i32 = arith.constant 1 : i32
    %0 = arith.muli %arg0, %c1_i32 : i32
    %1 = arith.addi %0, %arg1 : i32
    %c0_i32 = arith.constant 0 : i32
    %c0_i32_0 = arith.constant 0 : i32
    return %1, %c0_i32 : i32, i32
  }
  func.func @transform_1(%arg0: i32, %arg1: i32) -> (i32, i32) {
    %c1_i32 = arith.constant 1 : i32
    %0 = arith.muli %arg0, %c1_i32 : i32
    %1 = arith.addi %0, %arg1 : i32
    %c0_i32 = arith.constant 0 : i32
    %c0_i32_0 = arith.constant 0 : i32
    return %1, %c0_i32 : i32, i32
  }
  func.func @transform_2(%arg0: i32, %arg1: i32) -> (i32, i32) {
    %c0_i32 = arith.constant 0 : i32
    %c0_i32_0 = arith.constant 0 : i32
    %c0_i32_1 = arith.constant 0 : i32
    return %c0_i32, %c0_i32_0 : i32, i32
  }
  func.func @transform_3(%arg0: i32, %arg1: i32) -> (i32, i32) {
    %c0_i32 = arith.constant 0 : i32
    %c0_i32_0 = arith.constant 0 : i32
    %c0_i32_1 = arith.constant 0 : i32
    return %c0_i32, %c0_i32_0 : i32, i32
  }
  func.func @transform_4(%arg0: i32, %arg1: i32) -> (i32, i32) {
    %c0_i32 = arith.constant 0 : i32
    %c0_i32_0 = arith.constant 0 : i32
    %c0_i32_1 = arith.constant 0 : i32
    return %c0_i32, %c0_i32_0 : i32, i32
  }
  func.func @transform_5(%arg0: i32, %arg1: i32) -> (i32, i32) {
    %c0_i32 = arith.constant 0 : i32
    %c0_i32_0 = arith.constant 0 : i32
    %c0_i32_1 = arith.constant 0 : i32
    return %c0_i32, %c0_i32_0 : i32, i32
  }
  func.func @transform_6(%arg0: i32, %arg1: i32) -> (i32, i32) {
    %c0_i32 = arith.constant 0 : i32
    %c0_i32_0 = arith.constant 0 : i32
    %c0_i32_1 = arith.constant 0 : i32
    return %c0_i32, %c0_i32_0 : i32, i32
  }
  func.func @transform_7(%arg0: i32, %arg1: i32) -> (i32, i32) {
    %c0_i32 = arith.constant 0 : i32
    %c0_i32_0 = arith.constant 0 : i32
    %c0_i32_1 = arith.constant 0 : i32
    return %c0_i32, %c0_i32_0 : i32, i32
  }
  func.func @transform_8(%arg0: i32, %arg1: i32) -> (i32, i32) {
    %c0_i32 = arith.constant 0 : i32
    %c0_i32_0 = arith.constant 0 : i32
    %c0_i32_1 = arith.constant 0 : i32
    return %c0_i32, %c0_i32_0 : i32, i32
  }
  func.func @transform_9(%arg0: i32, %arg1: i32) -> (i32, i32) {
    %c0_i32 = arith.constant 0 : i32
    %c0_i32_0 = arith.constant 0 : i32
    return %arg0, %c0_i32 : i32, i32
  }
}

</mosaic_0001>

<llo_original>
// kernel: tpu_custom_call.1
$region0: #{tpu_custom_call.1}
  #allocation0 [shape = 'u32[]', space=smem, size = 0x4, offset = 0x4, fixed_abs, tag = 'smem constant byte address 0x4 - core index']
  #allocation1 [shape = 'u32[72,128]{1,0:T(1,128)}', space=vmem, size = 0x9000, scoped, tag = 'internal scratch']
  #allocation2 [shape = 'f32[256,1]{1,0:T(8,128)}', space=vmem, size = 0x20000, scoped, tag = 'scratch operand']
  %s0 = inlined_call_operand.vmem [shape: bf16[256,32], index: 0, kind: input, shape index: {}]
  %s1 = inlined_call_operand.vmem [shape: s32[256,1], index: 1, kind: input, shape index: {}]
  %s2 = inlined_call_operand.vmem [shape: f32[256,32], index: 2, kind: input, shape index: {}]
  %s3 = inlined_call_operand.vmem [shape: bf16[32,64], index: 3, kind: input, shape index: {}]
  %s4 = inlined_call_operand.vmem [shape: f32[1,64], index: 4, kind: input, shape index: {}]
  %s5 = inlined_call_operand.vmem [shape: bf16[64,32], index: 5, kind: input, shape index: {}]
  %s6 = inlined_call_operand.vmem [shape: f32[1,32], index: 6, kind: input, shape index: {}]
  %s7 = inlined_call_operand.vmem [shape: bf16[64,32], index: 7, kind: input, shape index: {}]
  %s8 = inlined_call_operand.vmem [shape: f32[1,32], index: 8, kind: input, shape index: {}]
  %s9 = inlined_call_operand.hbm [shape: f32[1,128], index: 9, kind: output, shape index: {}]
  %s10 = sld [smem:[#allocation0]]
  $region54: #{tpu_custom_call.1} parent=0
    _
  %s12 = ssub.s32 1, %s10
  %s13 = scalar_select 0, %s12, %s10
  $region1: #{tpu_custom_call.1} parent=0
    #allocation3 [shape = 'u8[512]{0}', space=vmem, size = 0x400, scoped, tag = 'output window, operand 0, single buffered']
    #allocation4 [shape = 's32[1]{0}', space=sflag, size = 0x4, scoped, tag = 'scoped memory for tpu_custom_call.1']
    %14 = vsyncpa [#allocation4], 0
    // Predicated region
    $region2: #{tpu_custom_call.1} parent=1 // pred_check
      _
    $region3: #{tpu_custom_call.1} parent=1 // pred_check_branch
      %16 = sbr.rel (0) target = $region5
    $region4: #{tpu_custom_call.1} parent=1 // pred_region
      %s17 = sadd.s32 0, 0
      %s18 = smul.u32 32, %s17
      %p19 = scmp.lt.s32.totalorder %s18, 31
      %s20 = scalar_select %p19, %s18, 31
      %s21 = smul.addr %s20, 4
      %s22 = scalar_lea.vmem %s0, %s21
      %s23 = sadd.s32 0, 0
      %s24 = smul.u32 32, %s23
    $region5: #{tpu_custom_call.1} parent=1 // pred_fallthru
      _
    // Predicated region
    $region6: #{tpu_custom_call.1} parent=1 // pred_check
      _
    $region7: #{tpu_custom_call.1} parent=1 // pred_check_branch
      %26 = sbr.rel (0) target = $region9
    $region8: #{tpu_custom_call.1} parent=1 // pred_region
      %s27 = sadd.s32 0, 0
      %s28 = smul.u32 32, %s27
      %p29 = scmp.lt.s32.totalorder %s28, 31
      %s30 = scalar_select %p29, %s28, 31
      %s31 = smul.addr %s30, 8
      %s32 = scalar_lea.vmem %s1, %s31
      %s33 = sadd.s32 0, 0
      %s34 = smul.u32 32, %s33
    $region9: #{tpu_custom_call.1} parent=1 // pred_fallthru
      _
    // Predicated region
    $region10: #{tpu_custom_call.1} parent=1 // pred_check
      _
    $region11: #{tpu_custom_call.1} parent=1 // pred_check_branch
      %36 = sbr.rel (0) target = $region13
    $region12: #{tpu_custom_call.1} parent=1 // pred_region
      _
    $region13: #{tpu_custom_call.1} parent=1 // pred_fallthru
      _
    // Predicated region
    $region14: #{tpu_custom_call.1} parent=1 // pred_check
      _
    $region15: #{tpu_custom_call.1} parent=1 // pred_check_branch
      %38 = sbr.rel (0) target = $region17
    $region16: #{tpu_custom_call.1} parent=1 // pred_region
      _
    $region17: #{tpu_custom_call.1} parent=1 // pred_fallthru
      _
    // Predicated region
    $region18: #{tpu_custom_call.1} parent=1 // pred_check
      _
    $region19: #{tpu_custom_call.1} parent=1 // pred_check_branch
      %40 = sbr.rel (0) target = $region21
    $region20: #{tpu_custom_call.1} parent=1 // pred_region
      _
    $region21: #{tpu_custom_call.1} parent=1 // pred_fallthru
      _
    // Predicated region
    $region22: #{tpu_custom_call.1} parent=1 // pred_check
      _
    $region23: #{tpu_custom_call.1} parent=1 // pred_check_branch
      %42 = sbr.rel (0) target = $region25
    $region24: #{tpu_custom_call.1} parent=1 // pred_region
      _
    $region25: #{tpu_custom_call.1} parent=1 // pred_fallthru
      _
    // Predicated region
    $region26: #{tpu_custom_call.1} parent=1 // pred_check
      _
    $region27: #{tpu_custom_call.1} parent=1 // pred_check_branch
      %44 = sbr.rel (0) target = $region29
    $region28: #{tpu_custom_call.1} parent=1 // pred_region
      _
    $region29: #{tpu_custom_call.1} parent=1 // pred_fallthru
      _
    // Predicated region
    $region30: #{tpu_custom_call.1} parent=1 // pred_check
      _
    $region31: #{tpu_custom_call.1} parent=1 // pred_check_branch
      %46 = sbr.rel (0) target = $region33
    $region32: #{tpu_custom_call.1} parent=1 // pred_region
      _
    $region33: #{tpu_custom_call.1} parent=1 // pred_fallthru
      _
    // Predicated region
    $region34: #{tpu_custom_call.1} parent=1 // pred_check
      _
    $region35: #{tpu_custom_call.1} parent=1 // pred_check_branch
      %48 = sbr.rel (0) target = $region37
    $region36: #{tpu_custom_call.1} parent=1 // pred_region
      _
    $region37: #{tpu_custom_call.1} parent=1 // pred_fallthru
      _
    %s49 = sadd.s32 0, 0
    %s50 = smul.u32 32, %s49
    %p51 = scmp.lt.s32.totalorder %s50, 31
    %s52 = scalar_select %p51, %s50, 31
    %s53 = smul.addr %s52, 4
    %s54 = scalar_lea.vmem %s0, %s53
    %s55 = sadd.s32 0, 0
    %s56 = smul.u32 32, %s55
    %p57 = scmp.lt.s32.totalorder %s56, 31
    %s58 = scalar_select %p57, %s56, 31
    %s59 = smul.addr %s58, 8
    %s60 = scalar_lea.vmem %s1, %s59
    %s61 = sadd.s32 0, 0
    %s62 = smul.u32 32, %s61
    %p63 = scmp.lt.s32.totalorder %s62, 31
    %s64 = scalar_select %p63, %s62, 31
    %s65 = smul.addr %s64, 4
    %s66 = scalar_lea.vmem %s0, %s65
    %s67 = sadd.s32 0, 0
    %s68 = smul.u32 32, %s67
    %s69 = sadd.s32 0, 0
    %s70 = smul.u32 32, %s69
    %p71 = scmp.lt.s32.totalorder %s70, 31
    %s72 = scalar_select %p71, %s70, 31
    %s73 = smul.addr %s72, 8
    %s74 = scalar_lea.vmem %s1, %s73
    %s75 = sadd.s32 0, 0
    %s76 = smul.u32 32, %s75
    %p78 = scmp.eq.s32.totalorder 0, 0
    // Predicated region
    $region38: #{tpu_custom_call.1} parent=1 // pred_check
      %p79 = pneg %p78
    $region39: #{tpu_custom_call.1} parent=1 // pred_check_branch
      %81 = sbr.rel (%p79) target = $region41
    $region40: #{tpu_custom_call.1} parent=1 // pred_region
      %vm82 = vcmask 7168
      %83 = vst.msk [vmem:[#allocation2] sm:$0xff] %vm82, 0.0
      %84 = vst.msk [vmem:[#allocation2 + $0x8] sm:$0xff] %vm82, 0.0
      %85 = vst.msk [vmem:[#allocation2 + $0x10] sm:$0xff] %vm82, 0.0
      %86 = vst.msk [vmem:[#allocation2 + $0x18] sm:$0xff] %vm82, 0.0
      %87 = vst.msk [vmem:[#allocation2 + $0x20] sm:$0xff] %vm82, 0.0
      %88 = vst.msk [vmem:[#allocation2 + $0x28] sm:$0xff] %vm82, 0.0
      %89 = vst.msk [vmem:[#allocation2 + $0x30] sm:$0xff] %vm82, 0.0
      %90 = vst.msk [vmem:[#allocation2 + $0x38] sm:$0xff] %vm82, 0.0
      %91 = vst.msk [vmem:[#allocation2 + $0x40] sm:$0xff] %vm82, 0.0
      %92 = vst.msk [vmem:[#allocation2 + $0x48] sm:$0xff] %vm82, 0.0
      %93 = vst.msk [vmem:[#allocation2 + $0x50] sm:$0xff] %vm82, 0.0
      %94 = vst.msk [vmem:[#allocation2 + $0x58] sm:$0xff] %vm82, 0.0
      %95 = vst.msk [vmem:[#allocation2 + $0x60] sm:$0xff] %vm82, 0.0
      %96 = vst.msk [vmem:[#allocation2 + $0x68] sm:$0xff] %vm82, 0.0
      %97 = vst.msk [vmem:[#allocation2 + $0x70] sm:$0xff] %vm82, 0.0
      %98 = vst.msk [vmem:[#allocation2 + $0x78] sm:$0xff] %vm82, 0.0
      %99 = vst.msk [vmem:[#allocation2 + $0x80] sm:$0xff] %vm82, 0.0
      %100 = vst.msk [vmem:[#allocation2 + $0x88] sm:$0xff] %vm82, 0.0
      %101 = vst.msk [vmem:[#allocation2 + $0x90] sm:$0xff] %vm82, 0.0
      %102 = vst.msk [vmem:[#allocation2 + $0x98] sm:$0xff] %vm82, 0.0
      %103 = vst.msk [vmem:[#allocation2 + $0xa0] sm:$0xff] %vm82, 0.0
      %104 = vst.msk [vmem:[#allocation2 + $0xa8] sm:$0xff] %vm82, 0.0
      %105 = vst.msk [vmem:[#allocation2 + $0xb0] sm:$0xff] %vm82, 0.0
      %106 = vst.msk [vmem:[#allocation2 + $0xb8] sm:$0xff] %vm82, 0.0
      %107 = vst.msk [vmem:[#allocation2 + $0xc0] sm:$0xff] %vm82, 0.0
      %108 = vst.msk [vmem:[#allocation2 + $0xc8] sm:$0xff] %vm82, 0.0
      %109 = vst.msk [vmem:[#allocation2 + $0xd0] sm:$0xff] %vm82, 0.0
      %110 = vst.msk [vmem:[#allocation2 + $0xd8] sm:$0xff] %vm82, 0.0
      %111 = vst.msk [vmem:[#allocation2 + $0xe0] sm:$0xff] %vm82, 0.0
      %112 = vst.msk [vmem:[#allocation2 + $0xe8] sm:$0xff] %vm82, 0.0
      %113 = vst.msk [vmem:[#allocation2 + $0xf0] sm:$0xff] %vm82, 0.0
      %114 = vst.msk [vmem:[#allocation2 + $0xf8] sm:$0xff] %vm82, 0.0
      %115 = vst [vmem:[#allocation3] sm:$0x1] 0.0
    $region41: #{tpu_custom_call.1} parent=1 // pred_fallthru
      _
    %v116 = vld [vmem:[%s66] sm:$0xf]
    %v117 = vld [vmem:[%s66 + $0x4] sm:$0xf]
    %v118 = vld [vmem:[%s66 + $0x8] sm:$0xf]
    %v119 = vld [vmem:[%s66 + $0xc] sm:$0xf]
    %v120 = vld [vmem:[%s66 + $0x10] sm:$0xf]
    %v121 = vld [vmem:[%s66 + $0x14] sm:$0xf]
    %v122 = vld [vmem:[%s66 + $0x18] sm:$0xf]
    %v123 = vld [vmem:[%s66 + $0x1c] sm:$0xf]
    %v124 = vld [vmem:[%s66 + $0x20] sm:$0xf]
    %v125 = vld [vmem:[%s66 + $0x24] sm:$0xf]
    %v126 = vld [vmem:[%s66 + $0x28] sm:$0xf]
    %v127 = vld [vmem:[%s66 + $0x2c] sm:$0xf]
    %v128 = vld [vmem:[%s66 + $0x30] sm:$0xf]
    %v129 = vld [vmem:[%s66 + $0x34] sm:$0xf]
    %v130 = vld [vmem:[%s66 + $0x38] sm:$0xf]
    %v131 = vld [vmem:[%s66 + $0x3c] sm:$0xf]
    %v132 = vld [vmem:[%s66 + $0x40] sm:$0xf]
    %v133 = vld [vmem:[%s66 + $0x44] sm:$0xf]
    %v134 = vld [vmem:[%s66 + $0x48] sm:$0xf]
    %v135 = vld [vmem:[%s66 + $0x4c] sm:$0xf]
    %v136 = vld [vmem:[%s66 + $0x50] sm:$0xf]
    %v137 = vld [vmem:[%s66 + $0x54] sm:$0xf]
    %v138 = vld [vmem:[%s66 + $0x58] sm:$0xf]
    %v139 = vld [vmem:[%s66 + $0x5c] sm:$0xf]
    %v140 = vld [vmem:[%s66 + $0x60] sm:$0xf]
    %v141 = vld [vmem:[%s66 + $0x64] sm:$0xf]
    %v142 = vld [vmem:[%s66 + $0x68] sm:$0xf]
    %v143 = vld [vmem:[%s66 + $0x6c] sm:$0xf]
    %v144 = vld [vmem:[%s66 + $0x70] sm:$0xf]
    %v145 = vld [vmem:[%s66 + $0x74] sm:$0xf]
    %v146 = vld [vmem:[%s66 + $0x78] sm:$0xf]
    %v147 = vld [vmem:[%s66 + $0x7c] sm:$0xf]
    %v148 = vld [vmem:[%s3] sm:$0xf]
    %v149 = vld [vmem:[%s3 + $0x4] sm:$0xf]
    %v150 = vld [vmem:[%s3 + $0x8] sm:$0xf]
    %v151 = vld [vmem:[%s3 + $0xc] sm:$0xf]
    %v152 = vld [vmem:[%s4] sm:$0x1]
    %v154 = vperm.slane %v152, 0
    %v188 = vunpack.c.l.b16 %v116
    %v189 = vunpack.c.l.b16 %v117
    %v190 = vunpack.c.l.b16 %v118
    %v191 = vunpack.c.l.b16 %v119
    %v192 = vunpack.c.l.b16 %v120
    %v193 = vunpack.c.l.b16 %v121
    %v194 = vunpack.c.l.b16 %v122
    %v195 = vunpack.c.l.b16 %v123
    %v196 = vunpack.c.l.b16 %v124
    %v197 = vunpack.c.l.b16 %v125
    %v198 = vunpack.c.l.b16 %v126
    %v199 = vunpack.c.l.b16 %v127
    %v200 = vunpack.c.l.b16 %v128
    %v201 = vunpack.c.l.b16 %v129
    %v202 = vunpack.c.l.b16 %v130
    %v203 = vunpack.c.l.b16 %v131
    %v204 = vunpack.c.l.b16 %v132
    %v205 = vunpack.c.l.b16 %v133
    %v206 = vunpack.c.l.b16 %v134
    %v207 = vunpack.c.l.b16 %v135
    %v208 = vunpack.c.l.b16 %v136
    %v209 = vunpack.c.l.b16 %v137
    %v210 = vunpack.c.l.b16 %v138
    %v211 = vunpack.c.l.b16 %v139
    %v212 = vunpack.c.l.b16 %v140
    %v213 = vunpack.c.l.b16 %v141
    %v214 = vunpack.c.l.b16 %v142
    %v215 = vunpack.c.l.b16 %v143
    %v216 = vunpack.c.l.b16 %v144
    %v217 = vunpack.c.l.b16 %v145
    %v218 = vunpack.c.l.b16 %v146
    %v219 = vunpack.c.l.b16 %v147
    %v220 = vpack.c.b16 %v189, %v188
    %v221 = vpack.c.b16 %v191, %v190
    %v222 = vpack.c.b16 %v193, %v192
    %v223 = vpack.c.b16 %v195, %v194
    %v224 = vpack.c.b16 %v197, %v196
    %v225 = vpack.c.b16 %v199, %v198
    %v226 = vpack.c.b16 %v201, %v200
    %v227 = vpack.c.b16 %v203, %v202
    %v228 = vpack.c.b16 %v205, %v204
    %v229 = vpack.c.b16 %v207, %v206
    %v230 = vpack.c.b16 %v209, %v208
    %v231 = vpack.c.b16 %v211, %v210
    %v232 = vpack.c.b16 %v213, %v212
    %v233 = vpack.c.b16 %v215, %v214
    %v234 = vpack.c.b16 %v217, %v216
    %v235 = vpack.c.b16 %v219, %v218
    %v240 = vunpack.c.l.b16 %v148
    %v241 = vunpack.c.l.b16 %v149
    %v242 = vunpack.c.l.b16 %v150
    %v243 = vunpack.c.l.b16 %v151
    %v244 = vpack.c.b16 %v241, %v240
    %v245 = vpack.c.b16 %v243, %v242
    %vm248 = vcmask 261120
    %v250 = vsel %vm248, %v220, 0
    %v253 = vsel %vm248, %v221, 0
    %v256 = vsel %vm248, %v222, 0
    %v259 = vsel %vm248, %v223, 0
    %v262 = vsel %vm248, %v224, 0
    %v265 = vsel %vm248, %v225, 0
    %v268 = vsel %vm248, %v226, 0
    %v271 = vsel %vm248, %v227, 0
    %v274 = vsel %vm248, %v228, 0
    %v277 = vsel %vm248, %v229, 0
    %v280 = vsel %vm248, %v230, 0
    %v283 = vsel %vm248, %v231, 0
    %v286 = vsel %vm248, %v232, 0
    %v289 = vsel %vm248, %v233, 0
    %v292 = vsel %vm248, %v234, 0
    %v295 = vsel %vm248, %v235, 0
    %297 = vmatpush.bf16.msra.mxu0 0
    %298 = vmatpush.bf16.msra.mxu0 0
    %299 = vmatpush.bf16.msra.mxu0 0
    %300 = vmatpush.bf16.msra.mxu0 0
    %301 = vmatpush.bf16.msra.mxu0 0
    %302 = vmatpush.bf16.msra.mxu0 0
    %303 = vmatpush.bf16.msra.mxu0 %v245
    %304 = vmatpush.bf16.msra.mxu0 %v244
    %305 = vmatmul.bf16.gmra.mxu0 %v250
    %v306 = vpop.f32.mrf.mxu0
    %v307 = vadd.f32 %v154, %v306
    %v308 = vpop.f32.mrf.mxu0
    %v309 = vadd.f32 %v154, %v308
    %310 = vmatmul.bf16.gmra.mxu0 %v253
    %v311 = vpop.f32.mrf.mxu0
    %v312 = vadd.f32 %v154, %v311
    %v313 = vpop.f32.mrf.mxu0
    %v314 = vadd.f32 %v154, %v313
    %315 = vmatmul.bf16.gmra.mxu0 %v256
    %v316 = vpop.f32.mrf.mxu0
    %v317 = vadd.f32 %v154, %v316
    %v318 = vpop.f32.mrf.mxu0
    %v319 = vadd.f32 %v154, %v318
    %320 = vmatmul.bf16.gmra.mxu0 %v259
    %v321 = vpop.f32.mrf.mxu0
    %v322 = vadd.f32 %v154, %v321
    %v323 = vpop.f32.mrf.mxu0
    %v324 = vadd.f32 %v154, %v323
    %325 = vmatmul.bf16.gmra.mxu0 %v262
    %v326 = vpop.f32.mrf.mxu0
    %v327 = vadd.f32 %v154, %v326
    %v328 = vpop.f32.mrf.mxu0
    %v329 = vadd.f32 %v154, %v328
    %330 = vmatmul.bf16.gmra.mxu0 %v265
    %v331 = vpop.f32.mrf.mxu0
    %v332 = vadd.f32 %v154, %v331
    %v333 = vpop.f32.mrf.mxu0
    %v334 = vadd.f32 %v154, %v333
    %335 = vmatmul.bf16.gmra.mxu0 %v268
    %v336 = vpop.f32.mrf.mxu0
    %v337 = vadd.f32 %v154, %v336
    %v338 = vpop.f32.mrf.mxu0
    %v339 = vadd.f32 %v154, %v338
    %340 = vmatmul.bf16.gmra.mxu0 %v271
    %v341 = vpop.f32.mrf.mxu0
    %v342 = vadd.f32 %v154, %v341
    %v343 = vpop.f32.mrf.mxu0
    %v344 = vadd.f32 %v154, %v343
    %345 = vmatmul.bf16.gmra.mxu0 %v274
    %v346 = vpop.f32.mrf.mxu0
    %v347 = vadd.f32 %v154, %v346
    %v348 = vpop.f32.mrf.mxu0
    %v349 = vadd.f32 %v154, %v348
    %350 = vmatmul.bf16.gmra.mxu0 %v277
    %v351 = vpop.f32.mrf.mxu0
    %v352 = vadd.f32 %v154, %v351
    %v353 = vpop.f32.mrf.mxu0
    %v354 = vadd.f32 %v154, %v353
    %355 = vmatmul.bf16.gmra.mxu0 %v280
    %v356 = vpop.f32.mrf.mxu0
    %v357 = vadd.f32 %v154, %v356
    %v358 = vpop.f32.mrf.mxu0
    %v359 = vadd.f32 %v154, %v358
    %360 = vmatmul.bf16.gmra.mxu0 %v283
    %v361 = vpop.f32.mrf.mxu0
    %v362 = vadd.f32 %v154, %v361
    %v363 = vpop.f32.mrf.mxu0
    %v364 = vadd.f32 %v154, %v363
    %365 = vmatmul.bf16.gmra.mxu0 %v286
    %v366 = vpop.f32.mrf.mxu0
    %v367 = vadd.f32 %v154, %v366
    %v368 = vpop.f32.mrf.mxu0
    %v369 = vadd.f32 %v154, %v368
    %370 = vmatmul.bf16.gmra.mxu0 %v289
    %v371 = vpop.f32.mrf.mxu0
    %v372 = vadd.f32 %v154, %v371
    %v373 = vpop.f32.mrf.mxu0
    %v374 = vadd.f32 %v154, %v373
    %375 = vmatmul.bf16.gmra.mxu0 %v292
    %v376 = vpop.f32.mrf.mxu0
    %v377 = vadd.f32 %v154, %v376
    %v378 = vpop.f32.mrf.mxu0
    %v379 = vadd.f32 %v154, %v378
    %380 = vmatmul.bf16.gmra.mxu0 %v295
    %v381 = vpop.f32.mrf.mxu0
    %v382 = vadd.f32 %v154, %v381
    %v383 = vpop.f32.mrf.mxu0
    %v384 = vadd.f32 %v154, %v383
    %385 = vdwg.mxu0
    %v386 = vmax.f32 %v307, 0.0
    %v387 = vmax.f32 %v309, 0.0
    %v388 = vmax.f32 %v312, 0.0
    %v389 = vmax.f32 %v314, 0.0
    %v390 = vmax.f32 %v317, 0.0
    %v391 = vmax.f32 %v319, 0.0
    %v392 = vmax.f32 %v322, 0.0
    %v393 = vmax.f32 %v324, 0.0
    %v394 = vmax.f32 %v327, 0.0
    %v395 = vmax.f32 %v329, 0.0
    %v396 = vmax.f32 %v332, 0.0
    %v397 = vmax.f32 %v334, 0.0
    %v398 = vmax.f32 %v337, 0.0
    %v399 = vmax.f32 %v339, 0.0
    %v400 = vmax.f32 %v342, 0.0
    %v401 = vmax.f32 %v344, 0.0
    %v402 = vmax.f32 %v347, 0.0
    %v403 = vmax.f32 %v349, 0.0
    %v404 = vmax.f32 %v352, 0.0
    %v405 = vmax.f32 %v354, 0.0
    %v406 = vmax.f32 %v357, 0.0
    %v407 = vmax.f32 %v359, 0.0
    %v408 = vmax.f32 %v362, 0.0
    %v409 = vmax.f32 %v364, 0.0
    %v410 = vmax.f32 %v367, 0.0
    %v411 = vmax.f32 %v369, 0.0
    %v412 = vmax.f32 %v372, 0.0
    %v413 = vmax.f32 %v374, 0.0
    %v414 = vmax.f32 %v377, 0.0
    %v415 = vmax.f32 %v379, 0.0
    %v416 = vmax.f32 %v382, 0.0
    %v417 = vmax.f32 %v384, 0.0
    %v418 = vpack.c.bf16 %v387, %v386
    %v419 = vpack.c.bf16 %v389, %v388
    %v420 = vpack.c.bf16 %v391, %v390
    %v421 = vpack.c.bf16 %v393, %v392
    %v422 = vpack.c.bf16 %v395, %v394
    %v423 = vpack.c.bf16 %v397, %v396
    %v424 = vpack.c.bf16 %v399, %v398
    %v425 = vpack.c.bf16 %v401, %v400
    %v426 = vpack.c.bf16 %v403, %v402
    %v427 = vpack.c.bf16 %v405, %v404
    %v428 = vpack.c.bf16 %v407, %v406
    %v429 = vpack.c.bf16 %v409, %v408
    %v430 = vpack.c.bf16 %v411, %v410
    %v431 = vpack.c.bf16 %v413, %v412
    %v432 = vpack.c.bf16 %v415, %v414
    %v433 = vpack.c.bf16 %v417, %v416
    %v434 = vld [vmem:[%s5] sm:$0xf]
    %v435 = vld [vmem:[%s5 + $0x4] sm:$0xf]
    %v436 = vld [vmem:[%s5 + $0x8] sm:$0xf]
    %v437 = vld [vmem:[%s5 + $0xc] sm:$0xf]
    %v438 = vld [vmem:[%s5 + $0x10] sm:$0xf]
    %v439 = vld [vmem:[%s5 + $0x14] sm:$0xf]
    %v440 = vld [vmem:[%s5 + $0x18] sm:$0xf]
    %v441 = vld [vmem:[%s5 + $0x1c] sm:$0xf]
    %v442 = vld [vmem:[%s6] sm:$0x1]
    %v444 = vperm.slane %v442, 0
    %v454 = vunpack.c.l.b16 %v434
    %v455 = vunpack.c.l.b16 %v435
    %v456 = vunpack.c.l.b16 %v436
    %v457 = vunpack.c.l.b16 %v437
    %v458 = vunpack.c.l.b16 %v438
    %v459 = vunpack.c.l.b16 %v439
    %v460 = vunpack.c.l.b16 %v440
    %v461 = vunpack.c.l.b16 %v441
    %v462 = vpack.c.b16 %v455, %v454
    %v463 = vpack.c.b16 %v457, %v456
    %v464 = vpack.c.b16 %v459, %v458
    %v465 = vpack.c.b16 %v461, %v460
    %vm470 = vcmask 523264
    %v472 = vsel %vm470, %v418, 0
    %v475 = vsel %vm470, %v419, 0
    %v478 = vsel %vm470, %v420, 0
    %v481 = vsel %vm470, %v421, 0
    %v484 = vsel %vm470, %v422, 0
    %v487 = vsel %vm470, %v423, 0
    %v490 = vsel %vm470, %v424, 0
    %v493 = vsel %vm470, %v425, 0
    %v496 = vsel %vm470, %v426, 0
    %v499 = vsel %vm470, %v427, 0
    %v502 = vsel %vm470, %v428, 0
    %v505 = vsel %vm470, %v429, 0
    %v508 = vsel %vm470, %v430, 0
    %v511 = vsel %vm470, %v431, 0
    %v514 = vsel %vm470, %v432, 0
    %v517 = vsel %vm470, %v433, 0
    %519 = vmatpush.bf16.msra.mxu0 0
    %520 = vmatpush.bf16.msra.mxu0 0
    %521 = vmatpush.bf16.msra.mxu0 0
    %522 = vmatpush.bf16.msra.mxu0 0
    %523 = vmatpush.bf16.msra.mxu0 %v465
    %524 = vmatpush.bf16.msra.mxu0 %v464
    %525 = vmatpush.bf16.msra.mxu0 %v463
    %526 = vmatpush.bf16.msra.mxu0 %v462
    %527 = vmatmul.bf16.gmra.mxu0 %v472
    %v528 = vpop.f32.mrf.mxu0
    %v529 = vadd.f32 %v444, %v528
    %v530 = vpop.f32.mrf.mxu0
    %v531 = vadd.f32 %v444, %v530
    %532 = vmatmul.bf16.gmra.mxu0 %v475
    %v533 = vpop.f32.mrf.mxu0
    %v534 = vadd.f32 %v444, %v533
    %v535 = vpop.f32.mrf.mxu0
    %v536 = vadd.f32 %v444, %v535
    %537 = vmatmul.bf16.gmra.mxu0 %v478
    %v538 = vpop.f32.mrf.mxu0
    %v539 = vadd.f32 %v444, %v538
    %v540 = vpop.f32.mrf.mxu0
    %v541 = vadd.f32 %v444, %v540
    %542 = vmatmul.bf16.gmra.mxu0 %v481
    %v543 = vpop.f32.mrf.mxu0
    %v544 = vadd.f32 %v444, %v543
    %v545 = vpop.f32.mrf.mxu0
    %v546 = vadd.f32 %v444, %v545
    %547 = vmatmul.bf16.gmra.mxu0 %v484
    %v548 = vpop.f32.mrf.mxu0
    %v549 = vadd.f32 %v444, %v548
    %v550 = vpop.f32.mrf.mxu0
    %v551 = vadd.f32 %v444, %v550
    %552 = vmatmul.bf16.gmra.mxu0 %v487
    %v553 = vpop.f32.mrf.mxu0
    %v554 = vadd.f32 %v444, %v553
    %v555 = vpop.f32.mrf.mxu0
    %v556 = vadd.f32 %v444, %v555
    %557 = vmatmul.bf16.gmra.mxu0 %v490
    %v558 = vpop.f32.mrf.mxu0
    %v559 = vadd.f32 %v444, %v558
    %v560 = vpop.f32.mrf.mxu0
    %v561 = vadd.f32 %v444, %v560
    %562 = vmatmul.bf16.gmra.mxu0 %v493
    %v563 = vpop.f32.mrf.mxu0
    %v564 = vadd.f32 %v444, %v563
    %v565 = vpop.f32.mrf.mxu0
    %v566 = vadd.f32 %v444, %v565
    %567 = vmatmul.bf16.gmra.mxu0 %v496
    %v568 = vpop.f32.mrf.mxu0
    %v569 = vadd.f32 %v444, %v568
    %v570 = vpop.f32.mrf.mxu0
    %v571 = vadd.f32 %v444, %v570
    %572 = vmatmul.bf16.gmra.mxu0 %v499
    %v573 = vpop.f32.mrf.mxu0
    %v574 = vadd.f32 %v444, %v573
    %v575 = vpop.f32.mrf.mxu0
    %v576 = vadd.f32 %v444, %v575
    %577 = vmatmul.bf16.gmra.mxu0 %v502
    %v578 = vpop.f32.mrf.mxu0
    %v579 = vadd.f32 %v444, %v578
    %v580 = vpop.f32.mrf.mxu0
    %v581 = vadd.f32 %v444, %v580
    %582 = vmatmul.bf16.gmra.mxu0 %v505
    %v583 = vpop.f32.mrf.mxu0
    %v584 = vadd.f32 %v444, %v583
    %v585 = vpop.f32.mrf.mxu0
    %v586 = vadd.f32 %v444, %v585
    %587 = vmatmul.bf16.gmra.mxu0 %v508
    %v588 = vpop.f32.mrf.mxu0
    %v589 = vadd.f32 %v444, %v588
    %v590 = vpop.f32.mrf.mxu0
    %v591 = vadd.f32 %v444, %v590
    %592 = vmatmul.bf16.gmra.mxu0 %v511
    %v593 = vpop.f32.mrf.mxu0
    %v594 = vadd.f32 %v444, %v593
    %v595 = vpop.f32.mrf.mxu0
    %v596 = vadd.f32 %v444, %v595
    %597 = vmatmul.bf16.gmra.mxu0 %v514
    %v598 = vpop.f32.mrf.mxu0
    %v599 = vadd.f32 %v444, %v598
    %v600 = vpop.f32.mrf.mxu0
    %v601 = vadd.f32 %v444, %v600
    %602 = vmatmul.bf16.gmra.mxu0 %v517
    %v603 = vpop.f32.mrf.mxu0
    %v604 = vadd.f32 %v444, %v603
    %v605 = vpop.f32.mrf.mxu0
    %v606 = vadd.f32 %v444, %v605
    %607 = vdwg.mxu0
    %v608 = vld [vmem:[%s7] sm:$0xf]
    %v609 = vld [vmem:[%s7 + $0x4] sm:$0xf]
    %v610 = vld [vmem:[%s7 + $0x8] sm:$0xf]
    %v611 = vld [vmem:[%s7 + $0xc] sm:$0xf]
    %v612 = vld [vmem:[%s7 + $0x10] sm:$0xf]
    %v613 = vld [vmem:[%s7 + $0x14] sm:$0xf]
    %v614 = vld [vmem:[%s7 + $0x18] sm:$0xf]
    %v615 = vld [vmem:[%s7 + $0x1c] sm:$0xf]
    %v616 = vld [vmem:[%s8] sm:$0x1]
    %v618 = vperm.slane %v616, 0
    %v628 = vunpack.c.l.b16 %v608
    %v629 = vunpack.c.l.b16 %v609
    %v630 = vunpack.c.l.b16 %v610
    %v631 = vunpack.c.l.b16 %v611
    %v632 = vunpack.c.l.b16 %v612
    %v633 = vunpack.c.l.b16 %v613
    %v634 = vunpack.c.l.b16 %v614
    %v635 = vunpack.c.l.b16 %v615
    %v636 = vpack.c.b16 %v629, %v628
    %v637 = vpack.c.b16 %v631, %v630
    %v638 = vpack.c.b16 %v633, %v632
    %v639 = vpack.c.b16 %v635, %v634
    %644 = vmatpush.bf16.msra.mxu0 0
    %645 = vmatpush.bf16.msra.mxu0 0
    %646 = vmatpush.bf16.msra.mxu0 0
    %647 = vmatpush.bf16.msra.mxu0 0
    %648 = vmatpush.bf16.msra.mxu0 %v639
    %649 = vmatpush.bf16.msra.mxu0 %v638
    %650 = vmatpush.bf16.msra.mxu0 %v637
    %651 = vmatpush.bf16.msra.mxu0 %v636
    %652 = vmatmul.bf16.gmra.mxu0 %v472
    %v653 = vpop.f32.mrf.mxu0
    %v654 = vadd.f32 %v618, %v653
    %v655 = vpop.f32.mrf.mxu0
    %v656 = vadd.f32 %v618, %v655
    %657 = vmatmul.bf16.gmra.mxu0 %v475
    %v658 = vpop.f32.mrf.mxu0
    %v659 = vadd.f32 %v618, %v658
    %v660 = vpop.f32.mrf.mxu0
    %v661 = vadd.f32 %v618, %v660
    %662 = vmatmul.bf16.gmra.mxu0 %v478
    %v663 = vpop.f32.mrf.mxu0
    %v664 = vadd.f32 %v618, %v663
    %v665 = vpop.f32.mrf.mxu0
    %v666 = vadd.f32 %v618, %v665
    %667 = vmatmul.bf16.gmra.mxu0 %v481
    %v668 = vpop.f32.mrf.mxu0
    %v669 = vadd.f32 %v618, %v668
    %v670 = vpop.f32.mrf.mxu0
    %v671 = vadd.f32 %v618, %v670
    %672 = vmatmul.bf16.gmra.mxu0 %v484
    %v673 = vpop.f32.mrf.mxu0
    %v674 = vadd.f32 %v618, %v673
    %v675 = vpop.f32.mrf.mxu0
    %v676 = vadd.f32 %v618, %v675
    %677 = vmatmul.bf16.gmra.mxu0 %v487
    %v678 = vpop.f32.mrf.mxu0
    %v679 = vadd.f32 %v618, %v678
    %v680 = vpop.f32.mrf.mxu0
    %v681 = vadd.f32 %v618, %v680
    %682 = vmatmul.bf16.gmra.mxu0 %v490
    %v683 = vpop.f32.mrf.mxu0
    %v684 = vadd.f32 %v618, %v683
    %v685 = vpop.f32.mrf.mxu0
    %v686 = vadd.f32 %v618, %v685
    %687 = vmatmul.bf16.gmra.mxu0 %v493
    %v688 = vpop.f32.mrf.mxu0
    %v689 = vadd.f32 %v618, %v688
    %v690 = vpop.f32.mrf.mxu0
    %v691 = vadd.f32 %v618, %v690
    %692 = vmatmul.bf16.gmra.mxu0 %v496
    %v693 = vpop.f32.mrf.mxu0
    %v694 = vadd.f32 %v618, %v693
    %v695 = vpop.f32.mrf.mxu0
    %v696 = vadd.f32 %v618, %v695
    %697 = vmatmul.bf16.gmra.mxu0 %v499
    %v698 = vpop.f32.mrf.mxu0
    %v699 = vadd.f32 %v618, %v698
    %v700 = vpop.f32.mrf.mxu0
    %v701 = vadd.f32 %v618, %v700
    %702 = vmatmul.bf16.gmra.mxu0 %v502
    %v703 = vpop.f32.mrf.mxu0
    %v704 = vadd.f32 %v618, %v703
    %v705 = vpop.f32.mrf.mxu0
    %v706 = vadd.f32 %v618, %v705
    %707 = vmatmul.bf16.gmra.mxu0 %v505
    %v708 = vpop.f32.mrf.mxu0
    %v709 = vadd.f32 %v618, %v708
    %v710 = vpop.f32.mrf.mxu0
    %v711 = vadd.f32 %v618, %v710
    %712 = vmatmul.bf16.gmra.mxu0 %v508
    %v713 = vpop.f32.mrf.mxu0
    %v714 = vadd.f32 %v618, %v713
    %v715 = vpop.f32.mrf.mxu0
    %v716 = vadd.f32 %v618, %v715
    %717 = vmatmul.bf16.gmra.mxu0 %v511
    %v718 = vpop.f32.mrf.mxu0
    %v719 = vadd.f32 %v618, %v718
    %v720 = vpop.f32.mrf.mxu0
    %v721 = vadd.f32 %v618, %v720
    %722 = vmatmul.bf16.gmra.mxu0 %v514
    %v723 = vpop.f32.mrf.mxu0
    %v724 = vadd.f32 %v618, %v723
    %v725 = vpop.f32.mrf.mxu0
    %v726 = vadd.f32 %v618, %v725
    %727 = vmatmul.bf16.gmra.mxu0 %v517
    %v728 = vpop.f32.mrf.mxu0
    %v729 = vadd.f32 %v618, %v728
    %v730 = vpop.f32.mrf.mxu0
    %v731 = vadd.f32 %v618, %v730
    %732 = vdwg.mxu0
    %s733 = sadd.s32 0, 0
    %s734 = smul.u32 %s733, 256
    %s735 = scalar_lea.vmem %s2, %s734
    %v736 = vld [vmem:[%s735] sm:$0xff]
    %v737 = vld [vmem:[%s735 + $0x8] sm:$0xff]
    %v738 = vld [vmem:[%s735 + $0x10] sm:$0xff]
    %v739 = vld [vmem:[%s735 + $0x18] sm:$0xff]
    %v740 = vld [vmem:[%s735 + $0x20] sm:$0xff]
    %v741 = vld [vmem:[%s735 + $0x28] sm:$0xff]
    %v742 = vld [vmem:[%s735 + $0x30] sm:$0xff]
    %v743 = vld [vmem:[%s735 + $0x38] sm:$0xff]
    %v744 = vld [vmem:[%s735 + $0x40] sm:$0xff]
    %v745 = vld [vmem:[%s735 + $0x48] sm:$0xff]
    %v746 = vld [vmem:[%s735 + $0x50] sm:$0xff]
    %v747 = vld [vmem:[%s735 + $0x58] sm:$0xff]
    %v748 = vld [vmem:[%s735 + $0x60] sm:$0xff]
    %v749 = vld [vmem:[%s735 + $0x68] sm:$0xff]
    %v750 = vld [vmem:[%s735 + $0x70] sm:$0xff]
    %v751 = vld [vmem:[%s735 + $0x78] sm:$0xff]
    %v752 = vld [vmem:[%s735 + $0x80] sm:$0xff]
    %v753 = vld [vmem:[%s735 + $0x88] sm:$0xff]
    %v754 = vld [vmem:[%s735 + $0x90] sm:$0xff]
    %v755 = vld [vmem:[%s735 + $0x98] sm:$0xff]
    %v756 = vld [vmem:[%s735 + $0xa0] sm:$0xff]
    %v757 = vld [vmem:[%s735 + $0xa8] sm:$0xff]
    %v758 = vld [vmem:[%s735 + $0xb0] sm:$0xff]
    %v759 = vld [vmem:[%s735 + $0xb8] sm:$0xff]
    %v760 = vld [vmem:[%s735 + $0xc0] sm:$0xff]
    %v761 = vld [vmem:[%s735 + $0xc8] sm:$0xff]
    %v762 = vld [vmem:[%s735 + $0xd0] sm:$0xff]
    %v763 = vld [vmem:[%s735 + $0xd8] sm:$0xff]
    %v764 = vld [vmem:[%s735 + $0xe0] sm:$0xff]
    %v765 = vld [vmem:[%s735 + $0xe8] sm:$0xff]
    %v766 = vld [vmem:[%s735 + $0xf0] sm:$0xff]
    %v767 = vld [vmem:[%s735 + $0xf8] sm:$0xff]
    %v768 = vld [vmem:[%s74] sm:$0xff]
    %v769 = vld [vmem:[%s74 + $0x8] sm:$0xff]
    %v770 = vld [vmem:[%s74 + $0x10] sm:$0xff]
    %v771 = vld [vmem:[%s74 + $0x18] sm:$0xff]
    %v772 = vld [vmem:[%s74 + $0x20] sm:$0xff]
    %v773 = vld [vmem:[%s74 + $0x28] sm:$0xff]
    %v774 = vld [vmem:[%s74 + $0x30] sm:$0xff]
    %v775 = vld [vmem:[%s74 + $0x38] sm:$0xff]
    %v776 = vld [vmem:[%s74 + $0x40] sm:$0xff]
    %v777 = vld [vmem:[%s74 + $0x48] sm:$0xff]
    %v778 = vld [vmem:[%s74 + $0x50] sm:$0xff]
    %v779 = vld [vmem:[%s74 + $0x58] sm:$0xff]
    %v780 = vld [vmem:[%s74 + $0x60] sm:$0xff]
    %v781 = vld [vmem:[%s74 + $0x68] sm:$0xff]
    %v782 = vld [vmem:[%s74 + $0x70] sm:$0xff]
    %v783 = vld [vmem:[%s74 + $0x78] sm:$0xff]
    %v784 = vld [vmem:[%s74 + $0x80] sm:$0xff]
    %v785 = vld [vmem:[%s74 + $0x88] sm:$0xff]
    %v786 = vld [vmem:[%s74 + $0x90] sm:$0xff]
    %v787 = vld [vmem:[%s74 + $0x98] sm:$0xff]
    %v788 = vld [vmem:[%s74 + $0xa0] sm:$0xff]
    %v789 = vld [vmem:[%s74 + $0xa8] sm:$0xff]
    %v790 = vld [vmem:[%s74 + $0xb0] sm:$0xff]
    %v791 = vld [vmem:[%s74 + $0xb8] sm:$0xff]
    %v792 = vld [vmem:[%s74 + $0xc0] sm:$0xff]
    %v793 = vld [vmem:[%s74 + $0xc8] sm:$0xff]
    %v794 = vld [vmem:[%s74 + $0xd0] sm:$0xff]
    %v795 = vld [vmem:[%s74 + $0xd8] sm:$0xff]
    %v796 = vld [vmem:[%s74 + $0xe0] sm:$0xff]
    %v797 = vld [vmem:[%s74 + $0xe8] sm:$0xff]
    %v798 = vld [vmem:[%s74 + $0xf0] sm:$0xff]
    %v799 = vld [vmem:[%s74 + $0xf8] sm:$0xff]
    %v800 = vlaneseq
    %v801 = vand.u32 %v800, 127
    %v802 = vadd.s32 %v801, 128
    %803 = vset.pattern.permute.xlu0 0
    %804 = vperm.xlu0 %803, %v768
    %v805 = vpop.permute.xlu0 %804
    %806 = vset.pattern.permute.xlu0 0
    %807 = vperm.xlu0 %806, %v769
    %v808 = vpop.permute.xlu0 %807
    %809 = vset.pattern.permute.xlu0 0
    %810 = vperm.xlu0 %809, %v770
    %v811 = vpop.permute.xlu0 %810
    %812 = vset.pattern.permute.xlu0 0
    %813 = vperm.xlu0 %812, %v771
    %v814 = vpop.permute.xlu0 %813
    %815 = vset.pattern.permute.xlu0 0
    %816 = vperm.xlu0 %815, %v772
    %v817 = vpop.permute.xlu0 %816
    %818 = vset.pattern.permute.xlu0 0
    %819 = vperm.xlu0 %818, %v773
    %v820 = vpop.permute.xlu0 %819
    %821 = vset.pattern.permute.xlu0 0
    %822 = vperm.xlu0 %821, %v774
    %v823 = vpop.permute.xlu0 %822
    %824 = vset.pattern.permute.xlu0 0
    %825 = vperm.xlu0 %824, %v775
    %v826 = vpop.permute.xlu0 %825
    %827 = vset.pattern.permute.xlu0 0
    %828 = vperm.xlu0 %827, %v776
    %v829 = vpop.permute.xlu0 %828
    %830 = vset.pattern.permute.xlu0 0
    %831 = vperm.xlu0 %830, %v777
    %v832 = vpop.permute.xlu0 %831
    %833 = vset.pattern.permute.xlu0 0
    %834 = vperm.xlu0 %833, %v778
    %v835 = vpop.permute.xlu0 %834
    %836 = vset.pattern.permute.xlu0 0
    %837 = vperm.xlu0 %836, %v779
    %v838 = vpop.permute.xlu0 %837
    %839 = vset.pattern.permute.xlu0 0
    %840 = vperm.xlu0 %839, %v780
    %v841 = vpop.permute.xlu0 %840
    %842 = vset.pattern.permute.xlu0 0
    %843 = vperm.xlu0 %842, %v781
    %v844 = vpop.permute.xlu0 %843
    %845 = vset.pattern.permute.xlu0 0
    %846 = vperm.xlu0 %845, %v782
    %v847 = vpop.permute.xlu0 %846
    %848 = vset.pattern.permute.xlu0 0
    %849 = vperm.xlu0 %848, %v783
    %v850 = vpop.permute.xlu0 %849
    %851 = vset.pattern.permute.xlu0 0
    %852 = vperm.xlu0 %851, %v784
    %v853 = vpop.permute.xlu0 %852
    %854 = vset.pattern.permute.xlu0 0
    %855 = vperm.xlu0 %854, %v785
    %v856 = vpop.permute.xlu0 %855
    %857 = vset.pattern.permute.xlu0 0
    %858 = vperm.xlu0 %857, %v786
    %v859 = vpop.permute.xlu0 %858
    %860 = vset.pattern.permute.xlu0 0
    %861 = vperm.xlu0 %860, %v787
    %v862 = vpop.permute.xlu0 %861
    %863 = vset.pattern.permute.xlu0 0
    %864 = vperm.xlu0 %863, %v788
    %v865 = vpop.permute.xlu0 %864
    %866 = vset.pattern.permute.xlu0 0
    %867 = vperm.xlu0 %866, %v789
    %v868 = vpop.permute.xlu0 %867
    %869 = vset.pattern.permute.xlu0 0
    %870 = vperm.xlu0 %869, %v790
    %v871 = vpop.permute.xlu0 %870
    %872 = vset.pattern.permute.xlu0 0
    %873 = vperm.xlu0 %872, %v791
    %v874 = vpop.permute.xlu0 %873
    %875 = vset.pattern.permute.xlu0 0
    %876 = vperm.xlu0 %875, %v792
    %v877 = vpop.permute.xlu0 %876
    %878 = vset.pattern.permute.xlu0 0
    %879 = vperm.xlu0 %878, %v793
    %v880 = vpop.permute.xlu0 %879
    %881 = vset.pattern.permute.xlu0 0
    %882 = vperm.xlu0 %881, %v794
    %v883 = vpop.permute.xlu0 %882
    %884 = vset.pattern.permute.xlu0 0
    %885 = vperm.xlu0 %884, %v795
    %v886 = vpop.permute.xlu0 %885
    %887 = vset.pattern.permute.xlu0 0
    %888 = vperm.xlu0 %887, %v796
    %v889 = vpop.permute.xlu0 %888
    %890 = vset.pattern.permute.xlu0 0
    %891 = vperm.xlu0 %890, %v797
    %v892 = vpop.permute.xlu0 %891
    %893 = vset.pattern.permute.xlu0 0
    %894 = vperm.xlu0 %893, %v798
    %v895 = vpop.permute.xlu0 %894
    %896 = vset.pattern.permute.xlu0 0
    %897 = vperm.xlu0 %896, %v799
    %v898 = vpop.permute.xlu0 %897
    %vm899 = vcmp.eq.s32.totalorder %v801, %v805
    %vm900 = vcmp.eq.s32.totalorder %v802, %v805
    %vm901 = vcmp.eq.s32.totalorder %v801, %v808
    %vm902 = vcmp.eq.s32.totalorder %v802, %v808
    %vm903 = vcmp.eq.s32.totalorder %v801, %v811
    %vm904 = vcmp.eq.s32.totalorder %v802, %v811
    %vm905 = vcmp.eq.s32.totalorder %v801, %v814
    %vm906 = vcmp.eq.s32.totalorder %v802, %v814
    %vm907 = vcmp.eq.s32.totalorder %v801, %v817
    %vm908 = vcmp.eq.s32.totalorder %v802, %v817
    %vm909 = vcmp.eq.s32.totalorder %v801, %v820
    %vm910 = vcmp.eq.s32.totalorder %v802, %v820
    %vm911 = vcmp.eq.s32.totalorder %v801, %v823
    %vm912 = vcmp.eq.s32.totalorder %v802, %v823
    %vm913 = vcmp.eq.s32.totalorder %v801, %v826
    %vm914 = vcmp.eq.s32.totalorder %v802, %v826
    %vm915 = vcmp.eq.s32.totalorder %v801, %v829
    %vm916 = vcmp.eq.s32.totalorder %v802, %v829
    %vm917 = vcmp.eq.s32.totalorder %v801, %v832
    %vm918 = vcmp.eq.s32.totalorder %v802, %v832
    %vm919 = vcmp.eq.s32.totalorder %v801, %v835
    %vm920 = vcmp.eq.s32.totalorder %v802, %v835
    %vm921 = vcmp.eq.s32.totalorder %v801, %v838
    %vm922 = vcmp.eq.s32.totalorder %v802, %v838
    %vm923 = vcmp.eq.s32.totalorder %v801, %v841
    %vm924 = vcmp.eq.s32.totalorder %v802, %v841
    %vm925 = vcmp.eq.s32.totalorder %v801, %v844
    %vm926 = vcmp.eq.s32.totalorder %v802, %v844
    %vm927 = vcmp.eq.s32.totalorder %v801, %v847
    %vm928 = vcmp.eq.s32.totalorder %v802, %v847
    %vm929 = vcmp.eq.s32.totalorder %v801, %v850
    %vm930 = vcmp.eq.s32.totalorder %v802, %v850
    %vm931 = vcmp.eq.s32.totalorder %v801, %v853
    %vm932 = vcmp.eq.s32.totalorder %v802, %v853
    %vm933 = vcmp.eq.s32.totalorder %v801, %v856
    %vm934 = vcmp.eq.s32.totalorder %v802, %v856
    %vm935 = vcmp.eq.s32.totalorder %v801, %v859
    %vm936 = vcmp.eq.s32.totalorder %v802, %v859
    %vm937 = vcmp.eq.s32.totalorder %v801, %v862
    %vm938 = vcmp.eq.s32.totalorder %v802, %v862
    %vm939 = vcmp.eq.s32.totalorder %v801, %v865
    %vm940 = vcmp.eq.s32.totalorder %v802, %v865
    %vm941 = vcmp.eq.s32.totalorder %v801, %v868
    %vm942 = vcmp.eq.s32.totalorder %v802, %v868
    %vm943 = vcmp.eq.s32.totalorder %v801, %v871
    %vm944 = vcmp.eq.s32.totalorder %v802, %v871
    %vm945 = vcmp.eq.s32.totalorder %v801, %v874
    %vm946 = vcmp.eq.s32.totalorder %v802, %v874
    %vm947 = vcmp.eq.s32.totalorder %v801, %v877
    %vm948 = vcmp.eq.s32.totalorder %v802, %v877
    %vm949 = vcmp.eq.s32.totalorder %v801, %v880
    %vm950 = vcmp.eq.s32.totalorder %v802, %v880
    %vm951 = vcmp.eq.s32.totalorder %v801, %v883
    %vm952 = vcmp.eq.s32.totalorder %v802, %v883
    %vm953 = vcmp.eq.s32.totalorder %v801, %v886
    %vm954 = vcmp.eq.s32.totalorder %v802, %v886
    %vm955 = vcmp.eq.s32.totalorder %v801, %v889
    %vm956 = vcmp.eq.s32.totalorder %v802, %v889
    %vm957 = vcmp.eq.s32.totalorder %v801, %v892
    %vm958 = vcmp.eq.s32.totalorder %v802, %v892
    %vm959 = vcmp.eq.s32.totalorder %v801, %v895
    %vm960 = vcmp.eq.s32.totalorder %v802, %v895
    %vm961 = vcmp.eq.s32.totalorder %v801, %v898
    %vm962 = vcmp.eq.s32.totalorder %v802, %v898
    %v963 = vsel %vm899, 1.0, 0.0
    %v964 = vsel %vm900, 1.0, 0.0
    %v965 = vsel %vm901, 1.0, 0.0
    %v966 = vsel %vm902, 1.0, 0.0
    %v967 = vsel %vm903, 1.0, 0.0
    %v968 = vsel %vm904, 1.0, 0.0
    %v969 = vsel %vm905, 1.0, 0.0
    %v970 = vsel %vm906, 1.0, 0.0
    %v971 = vsel %vm907, 1.0, 0.0
    %v972 = vsel %vm908, 1.0, 0.0
    %v973 = vsel %vm909, 1.0, 0.0
    %v974 = vsel %vm910, 1.0, 0.0
    %v975 = vsel %vm911, 1.0, 0.0
    %v976 = vsel %vm912, 1.0, 0.0
    %v977 = vsel %vm913, 1.0, 0.0
    %v978 = vsel %vm914, 1.0, 0.0
    %v979 = vsel %vm915, 1.0, 0.0
    %v980 = vsel %vm916, 1.0, 0.0
    %v981 = vsel %vm917, 1.0, 0.0
    %v982 = vsel %vm918, 1.0, 0.0
    %v983 = vsel %vm919, 1.0, 0.0
    %v984 = vsel %vm920, 1.0, 0.0
    %v985 = vsel %vm921, 1.0, 0.0
    %v986 = vsel %vm922, 1.0, 0.0
    %v987 = vsel %vm923, 1.0, 0.0
    %v988 = vsel %vm924, 1.0, 0.0
    %v989 = vsel %vm925, 1.0, 0.0
    %v990 = vsel %vm926, 1.0, 0.0
    %v991 = vsel %vm927, 1.0, 0.0
    %v992 = vsel %vm928, 1.0, 0.0
    %v993 = vsel %vm929, 1.0, 0.0
    %v994 = vsel %vm930, 1.0, 0.0
    %v995 = vsel %vm931, 1.0, 0.0
    %v996 = vsel %vm932, 1.0, 0.0
    %v997 = vsel %vm933, 1.0, 0.0
    %v998 = vsel %vm934, 1.0, 0.0
    %v999 = vsel %vm935, 1.0, 0.0
    %v1000 = vsel %vm936, 1.0, 0.0
    %v1001 = vsel %vm937, 1.0, 0.0
    %v1002 = vsel %vm938, 1.0, 0.0
    %v1003 = vsel %vm939, 1.0, 0.0
    %v1004 = vsel %vm940, 1.0, 0.0
    %v1005 = vsel %vm941, 1.0, 0.0
    %v1006 = vsel %vm942, 1.0, 0.0
    %v1007 = vsel %vm943, 1.0, 0.0
    %v1008 = vsel %vm944, 1.0, 0.0
    %v1009 = vsel %vm945, 1.0, 0.0
    %v1010 = vsel %vm946, 1.0, 0.0
    %v1011 = vsel %vm947, 1.0, 0.0
    %v1012 = vsel %vm948, 1.0, 0.0
    %v1013 = vsel %vm949, 1.0, 0.0
    %v1014 = vsel %vm950, 1.0, 0.0
    %v1015 = vsel %vm951, 1.0, 0.0
    %v1016 = vsel %vm952, 1.0, 0.0
    %v1017 = vsel %vm953, 1.0, 0.0
    %v1018 = vsel %vm954, 1.0, 0.0
    %v1019 = vsel %vm955, 1.0, 0.0
    %v1020 = vsel %vm956, 1.0, 0.0
    %v1021 = vsel %vm957, 1.0, 0.0
    %v1022 = vsel %vm958, 1.0, 0.0
    %v1023 = vsel %vm959, 1.0, 0.0
    %v1024 = vsel %vm960, 1.0, 0.0
    %v1025 = vsel %vm961, 1.0, 0.0
    %v1026 = vsel %vm962, 1.0, 0.0
    %v1027 = vpack.c.bf16 %v965, %v963
    %v1028 = vpack.c.bf16 %v966, %v964
    %v1029 = vpack.c.bf16 %v969, %v967
    %v1030 = vpack.c.bf16 %v970, %v968
    %v1031 = vpack.c.bf16 %v973, %v971
    %v1032 = vpack.c.bf16 %v974, %v972
    %v1033 = vpack.c.bf16 %v977, %v975
    %v1034 = vpack.c.bf16 %v978, %v976
    %v1035 = vpack.c.bf16 %v981, %v979
    %v1036 = vpack.c.bf16 %v982, %v980
    %v1037 = vpack.c.bf16 %v985, %v983
    %v1038 = vpack.c.bf16 %v986, %v984
    %v1039 = vpack.c.bf16 %v989, %v987
    %v1040 = vpack.c.bf16 %v990, %v988
    %v1041 = vpack.c.bf16 %v993, %v991
    %v1042 = vpack.c.bf16 %v994, %v992
    %v1043 = vpack.c.bf16 %v997, %v995
    %v1044 = vpack.c.bf16 %v998, %v996
    %v1045 = vpack.c.bf16 %v1001, %v999
    %v1046 = vpack.c.bf16 %v1002, %v1000
    %v1047 = vpack.c.bf16 %v1005, %v1003
    %v1048 = vpack.c.bf16 %v1006, %v1004
    %v1049 = vpack.c.bf16 %v1009, %v1007
    %v1050 = vpack.c.bf16 %v1010, %v1008
    %v1051 = vpack.c.bf16 %v1013, %v1011
    %v1052 = vpack.c.bf16 %v1014, %v1012
    %v1053 = vpack.c.bf16 %v1017, %v1015
    %v1054 = vpack.c.bf16 %v1018, %v1016
    %v1055 = vpack.c.bf16 %v1021, %v1019
    %v1056 = vpack.c.bf16 %v1022, %v1020
    %v1057 = vpack.c.bf16 %v1025, %v1023
    %v1058 = vpack.c.bf16 %v1026, %v1024
    %v1059 = vld [vmem:[%s2] sm:$0xff]
    %v1060 = vld [vmem:[%s2 + $0x8] sm:$0xff]
    %v1061 = vld [vmem:[%s2 + $0x10] sm:$0xff]
    %v1062 = vld [vmem:[%s2 + $0x18] sm:$0xff]
    %v1063 = vld [vmem:[%s2 + $0x20] sm:$0xff]
    %v1064 = vld [vmem:[%s2 + $0x28] sm:$0xff]
    %v1065 = vld [vmem:[%s2 + $0x30] sm:$0xff]
    %v1066 = vld [vmem:[%s2 + $0x38] sm:$0xff]
    %v1067 = vld [vmem:[%s2 + $0x40] sm:$0xff]
    %v1068 = vld [vmem:[%s2 + $0x48] sm:$0xff]
    %v1069 = vld [vmem:[%s2 + $0x50] sm:$0xff]
    %v1070 = vld [vmem:[%s2 + $0x58] sm:$0xff]
    %v1071 = vld [vmem:[%s2 + $0x60] sm:$0xff]
    %v1072 = vld [vmem:[%s2 + $0x68] sm:$0xff]
    %v1073 = vld [vmem:[%s2 + $0x70] sm:$0xff]
    %v1074 = vld [vmem:[%s2 + $0x78] sm:$0xff]
    %v1075 = vld [vmem:[%s2 + $0x80] sm:$0xff]
    %v1076 = vld [vmem:[%s2 + $0x88] sm:$0xff]
    %v1077 = vld [vmem:[%s2 + $0x90] sm:$0xff]
    %v1078 = vld [vmem:[%s2 + $0x98] sm:$0xff]
    %v1079 = vld [vmem:[%s2 + $0xa0] sm:$0xff]
    %v1080 = vld [vmem:[%s2 + $0xa8] sm:$0xff]
    %v1081 = vld [vmem:[%s2 + $0xb0] sm:$0xff]
    %v1082 = vld [vmem:[%s2 + $0xb8] sm:$0xff]
    %v1083 = vld [vmem:[%s2 + $0xc0] sm:$0xff]
    %v1084 = vld [vmem:[%s2 + $0xc8] sm:$0xff]
    %v1085 = vld [vmem:[%s2 + $0xd0] sm:$0xff]
    %v1086 = vld [vmem:[%s2 + $0xd8] sm:$0xff]
    %v1087 = vld [vmem:[%s2 + $0xe0] sm:$0xff]
    %v1088 = vld [vmem:[%s2 + $0xe8] sm:$0xff]
    %v1089 = vld [vmem:[%s2 + $0xf0] sm:$0xff]
    %v1090 = vld [vmem:[%s2 + $0xf8] sm:$0xff]
    %v1091 = vpack.c.bf16 %v1060, %v1059
    %v1092 = vpack.c.bf16 %v1062, %v1061
    %v1093 = vpack.c.bf16 %v1064, %v1063
    %v1094 = vpack.c.bf16 %v1066, %v1065
    %v1095 = vpack.c.bf16 %v1068, %v1067
    %v1096 = vpack.c.bf16 %v1070, %v1069
    %v1097 = vpack.c.bf16 %v1072, %v1071
    %v1098 = vpack.c.bf16 %v1074, %v1073
    %v1099 = vpack.c.bf16 %v1076, %v1075
    %v1100 = vpack.c.bf16 %v1078, %v1077
    %v1101 = vpack.c.bf16 %v1080, %v1079
    %v1102 = vpack.c.bf16 %v1082, %v1081
    %v1103 = vpack.c.bf16 %v1084, %v1083
    %v1104 = vpack.c.bf16 %v1086, %v1085
    %v1105 = vpack.c.bf16 %v1088, %v1087
    %v1106 = vpack.c.bf16 %v1090, %v1089
    %1107 = vmatpush.bf16.msra.mxu0 %v1098
    %1108 = vmatpush.bf16.msra.mxu0 %v1097
    %1109 = vmatpush.bf16.msra.mxu0 %v1096
    %1110 = vmatpush.bf16.msra.mxu0 %v1095
    %1111 = vmatpush.bf16.msra.mxu0 %v1094
    %1112 = vmatpush.bf16.msra.mxu0 %v1093
    %1113 = vmatpush.bf16.msra.mxu0 %v1092
    %1114 = vmatpush.bf16.msra.mxu0 %v1091
    %1115 = vmatmul.bf16.gmra.mxu0 %v1027
    %v1116 = vpop.f32.mrf.mxu0
    %v1117 = vadd.f32 0.0, %v1116
    %v1118 = vpop.f32.mrf.mxu0
    %v1119 = vadd.f32 0.0, %v1118
    %1120 = vmatmul.bf16.gmra.mxu0 %v1029
    %v1121 = vpop.f32.mrf.mxu0
    %v1122 = vadd.f32 0.0, %v1121
    %v1123 = vpop.f32.mrf.mxu0
    %v1124 = vadd.f32 0.0, %v1123
    %1125 = vmatmul.bf16.gmra.mxu0 %v1031
    %v1126 = vpop.f32.mrf.mxu0
    %v1127 = vadd.f32 0.0, %v1126
    %v1128 = vpop.f32.mrf.mxu0
    %v1129 = vadd.f32 0.0, %v1128
    %1130 = vmatmul.bf16.gmra.mxu0 %v1033
    %v1131 = vpop.f32.mrf.mxu0
    %v1132 = vadd.f32 0.0, %v1131
    %v1133 = vpop.f32.mrf.mxu0
    %v1134 = vadd.f32 0.0, %v1133
    %1135 = vmatmul.bf16.gmra.mxu0 %v1035
    %v1136 = vpop.f32.mrf.mxu0
    %v1137 = vadd.f32 0.0, %v1136
    %v1138 = vpop.f32.mrf.mxu0
    %v1139 = vadd.f32 0.0, %v1138
    %1140 = vmatmul.bf16.gmra.mxu0 %v1037
    %v1141 = vpop.f32.mrf.mxu0
    %v1142 = vadd.f32 0.0, %v1141
    %v1143 = vpop.f32.mrf.mxu0
    %v1144 = vadd.f32 0.0, %v1143
    %1145 = vmatmul.bf16.gmra.mxu0 %v1039
    %v1146 = vpop.f32.mrf.mxu0
    %v1147 = vadd.f32 0.0, %v1146
    %v1148 = vpop.f32.mrf.mxu0
    %v1149 = vadd.f32 0.0, %v1148
    %1150 = vmatmul.bf16.gmra.mxu0 %v1041
    %v1151 = vpop.f32.mrf.mxu0
    %v1152 = vadd.f32 0.0, %v1151
    %v1153 = vpop.f32.mrf.mxu0
    %v1154 = vadd.f32 0.0, %v1153
    %1155 = vmatmul.bf16.gmra.mxu0 %v1043
    %v1156 = vpop.f32.mrf.mxu0
    %v1157 = vadd.f32 0.0, %v1156
    %v1158 = vpop.f32.mrf.mxu0
    %v1159 = vadd.f32 0.0, %v1158
    %1160 = vmatmul.bf16.gmra.mxu0 %v1045
    %v1161 = vpop.f32.mrf.mxu0
    %v1162 = vadd.f32 0.0, %v1161
    %v1163 = vpop.f32.mrf.mxu0
    %v1164 = vadd.f32 0.0, %v1163
    %1165 = vmatmul.bf16.gmra.mxu0 %v1047
    %v1166 = vpop.f32.mrf.mxu0
    %v1167 = vadd.f32 0.0, %v1166
    %v1168 = vpop.f32.mrf.mxu0
    %v1169 = vadd.f32 0.0, %v1168
    %1170 = vmatmul.bf16.gmra.mxu0 %v1049
    %v1171 = vpop.f32.mrf.mxu0
    %v1172 = vadd.f32 0.0, %v1171
    %v1173 = vpop.f32.mrf.mxu0
    %v1174 = vadd.f32 0.0, %v1173
    %1175 = vmatmul.bf16.gmra.mxu0 %v1051
    %v1176 = vpop.f32.mrf.mxu0
    %v1177 = vadd.f32 0.0, %v1176
    %v1178 = vpop.f32.mrf.mxu0
    %v1179 = vadd.f32 0.0, %v1178
    %1180 = vmatmul.bf16.gmra.mxu0 %v1053
    %v1181 = vpop.f32.mrf.mxu0
    %v1182 = vadd.f32 0.0, %v1181
    %v1183 = vpop.f32.mrf.mxu0
    %v1184 = vadd.f32 0.0, %v1183
    %1185 = vmatmul.bf16.gmra.mxu0 %v1055
    %v1186 = vpop.f32.mrf.mxu0
    %v1187 = vadd.f32 0.0, %v1186
    %v1188 = vpop.f32.mrf.mxu0
    %v1189 = vadd.f32 0.0, %v1188
    %1190 = vmatmul.bf16.gmra.mxu0 %v1057
    %v1191 = vpop.f32.mrf.mxu0
    %v1192 = vadd.f32 0.0, %v1191
    %v1193 = vpop.f32.mrf.mxu0
    %v1194 = vadd.f32 0.0, %v1193
    %1195 = vdwg.mxu0
    %1196 = vmatpush.bf16.msra.mxu0 %v1106
    %1197 = vmatpush.bf16.msra.mxu0 %v1105
    %1198 = vmatpush.bf16.msra.mxu0 %v1104
    %1199 = vmatpush.bf16.msra.mxu0 %v1103
    %1200 = vmatpush.bf16.msra.mxu0 %v1102
    %1201 = vmatpush.bf16.msra.mxu0 %v1101
    %1202 = vmatpush.bf16.msra.mxu0 %v1100
    %1203 = vmatpush.bf16.msra.mxu0 %v1099
    %1204 = vmatmul.bf16.gmra.mxu0 %v1028
    %v1205 = vpop.f32.mrf.mxu0
    %v1206 = vadd.f32 %v1117, %v1205
    %v1207 = vpop.f32.mrf.mxu0
    %v1208 = vadd.f32 %v1119, %v1207
    %1209 = vmatmul.bf16.gmra.mxu0 %v1030
    %v1210 = vpop.f32.mrf.mxu0
    %v1211 = vadd.f32 %v1122, %v1210
    %v1212 = vpop.f32.mrf.mxu0
    %v1213 = vadd.f32 %v1124, %v1212
    %1214 = vmatmul.bf16.gmra.mxu0 %v1032
    %v1215 = vpop.f32.mrf.mxu0
    %v1216 = vadd.f32 %v1127, %v1215
    %v1217 = vpop.f32.mrf.mxu0
    %v1218 = vadd.f32 %v1129, %v1217
    %1219 = vmatmul.bf16.gmra.mxu0 %v1034
    %v1220 = vpop.f32.mrf.mxu0
    %v1221 = vadd.f32 %v1132, %v1220
    %v1222 = vpop.f32.mrf.mxu0
    %v1223 = vadd.f32 %v1134, %v1222
    %1224 = vmatmul.bf16.gmra.mxu0 %v1036
    %v1225 = vpop.f32.mrf.mxu0
    %v1226 = vadd.f32 %v1137, %v1225
    %v1227 = vpop.f32.mrf.mxu0
    %v1228 = vadd.f32 %v1139, %v1227
    %1229 = vmatmul.bf16.gmra.mxu0 %v1038
    %v1230 = vpop.f32.mrf.mxu0
    %v1231 = vadd.f32 %v1142, %v1230
    %v1232 = vpop.f32.mrf.mxu0
    %v1233 = vadd.f32 %v1144, %v1232
    %1234 = vmatmul.bf16.gmra.mxu0 %v1040
    %v1235 = vpop.f32.mrf.mxu0
    %v1236 = vadd.f32 %v1147, %v1235
    %v1237 = vpop.f32.mrf.mxu0
    %v1238 = vadd.f32 %v1149, %v1237
    %1239 = vmatmul.bf16.gmra.mxu0 %v1042
    %v1240 = vpop.f32.mrf.mxu0
    %v1241 = vadd.f32 %v1152, %v1240
    %v1242 = vpop.f32.mrf.mxu0
    %v1243 = vadd.f32 %v1154, %v1242
    %1244 = vmatmul.bf16.gmra.mxu0 %v1044
    %v1245 = vpop.f32.mrf.mxu0
    %v1246 = vadd.f32 %v1157, %v1245
    %v1247 = vpop.f32.mrf.mxu0
    %v1248 = vadd.f32 %v1159, %v1247
    %1249 = vmatmul.bf16.gmra.mxu0 %v1046
    %v1250 = vpop.f32.mrf.mxu0
    %v1251 = vadd.f32 %v1162, %v1250
    %v1252 = vpop.f32.mrf.mxu0
    %v1253 = vadd.f32 %v1164, %v1252
    %1254 = vmatmul.bf16.gmra.mxu0 %v1048
    %v1255 = vpop.f32.mrf.mxu0
    %v1256 = vadd.f32 %v1167, %v1255
    %v1257 = vpop.f32.mrf.mxu0
    %v1258 = vadd.f32 %v1169, %v1257
    %1259 = vmatmul.bf16.gmra.mxu0 %v1050
    %v1260 = vpop.f32.mrf.mxu0
    %v1261 = vadd.f32 %v1172, %v1260
    %v1262 = vpop.f32.mrf.mxu0
    %v1263 = vadd.f32 %v1174, %v1262
    %1264 = vmatmul.bf16.gmra.mxu0 %v1052
    %v1265 = vpop.f32.mrf.mxu0
    %v1266 = vadd.f32 %v1177, %v1265
    %v1267 = vpop.f32.mrf.mxu0
    %v1268 = vadd.f32 %v1179, %v1267
    %1269 = vmatmul.bf16.gmra.mxu0 %v1054
    %v1270 = vpop.f32.mrf.mxu0
    %v1271 = vadd.f32 %v1182, %v1270
    %v1272 = vpop.f32.mrf.mxu0
    %v1273 = vadd.f32 %v1184, %v1272
    %1274 = vmatmul.bf16.gmra.mxu0 %v1056
    %v1275 = vpop.f32.mrf.mxu0
    %v1276 = vadd.f32 %v1187, %v1275
    %v1277 = vpop.f32.mrf.mxu0
    %v1278 = vadd.f32 %v1189, %v1277
    %1279 = vmatmul.bf16.gmra.mxu0 %v1058
    %v1280 = vpop.f32.mrf.mxu0
    %v1281 = vadd.f32 %v1192, %v1280
    %v1282 = vpop.f32.mrf.mxu0
    %v1283 = vadd.f32 %v1194, %v1282
    %1284 = vdwg.mxu0
    %v1285 = vsub.f32 0.0, %v654
    %v1286 = vsub.f32 0.0, %v656
    %v1287 = vsub.f32 0.0, %v659
    %v1288 = vsub.f32 0.0, %v661
    %v1289 = vsub.f32 0.0, %v664
    %v1290 = vsub.f32 0.0, %v666
    %v1291 = vsub.f32 0.0, %v669
    %v1292 = vsub.f32 0.0, %v671
    %v1293 = vsub.f32 0.0, %v674
    %v1294 = vsub.f32 0.0, %v676
    %v1295 = vsub.f32 0.0, %v679
    %v1296 = vsub.f32 0.0, %v681
    %v1297 = vsub.f32 0.0, %v684
    %v1298 = vsub.f32 0.0, %v686
    %v1299 = vsub.f32 0.0, %v689
    %v1300 = vsub.f32 0.0, %v691
    %v1301 = vsub.f32 0.0, %v694
    %v1302 = vsub.f32 0.0, %v696
    %v1303 = vsub.f32 0.0, %v699
    %v1304 = vsub.f32 0.0, %v701
    %v1305 = vsub.f32 0.0, %v704
    %v1306 = vsub.f32 0.0, %v706
    %v1307 = vsub.f32 0.0, %v709
    %v1308 = vsub.f32 0.0, %v711
    %v1309 = vsub.f32 0.0, %v714
    %v1310 = vsub.f32 0.0, %v716
    %v1311 = vsub.f32 0.0, %v719
    %v1312 = vsub.f32 0.0, %v721
    %v1313 = vsub.f32 0.0, %v724
    %v1314 = vsub.f32 0.0, %v726
    %v1315 = vsub.f32 0.0, %v729
    %v1316 = vsub.f32 0.0, %v731
    %v1317 = vmul.f32 %v1285, 1.442695
    %v1318 = vpow.pop %v1317
    %v1319 = vmul.f32 %v1286, 1.442695
    %v1320 = vpow.pop %v1319
    %v1321 = vmul.f32 %v1287, 1.442695
    %v1322 = vpow.pop %v1321
    %v1323 = vmul.f32 %v1288, 1.442695
    %v1324 = vpow.pop %v1323
    %v1325 = vmul.f32 %v1289, 1.442695
    %v1326 = vpow.pop %v1325
    %v1327 = vmul.f32 %v1290, 1.442695
    %v1328 = vpow.pop %v1327
    %v1329 = vmul.f32 %v1291, 1.442695
    %v1330 = vpow.pop %v1329
    %v1331 = vmul.f32 %v1292, 1.442695
    %v1332 = vpow.pop %v1331
    %v1333 = vmul.f32 %v1293, 1.442695
    %v1334 = vpow.pop %v1333
    %v1335 = vmul.f32 %v1294, 1.442695
    %v1336 = vpow.pop %v1335
    %v1337 = vmul.f32 %v1295, 1.442695
    %v1338 = vpow.pop %v1337
    %v1339 = vmul.f32 %v1296, 1.442695
    %v1340 = vpow.pop %v1339
    %v1341 = vmul.f32 %v1297, 1.442695
    %v1342 = vpow.pop %v1341
    %v1343 = vmul.f32 %v1298, 1.442695
    %v1344 = vpow.pop %v1343
    %v1345 = vmul.f32 %v1299, 1.442695
    %v1346 = vpow.pop %v1345
    %v1347 = vmul.f32 %v1300, 1.442695
    %v1348 = vpow.pop %v1347
    %v1349 = vmul.f32 %v1301, 1.442695
    %v1350 = vpow.pop %v1349
    %v1351 = vmul.f32 %v1302, 1.442695
    %v1352 = vpow.pop %v1351
    %v1353 = vmul.f32 %v1303, 1.442695
    %v1354 = vpow.pop %v1353
    %v1355 = vmul.f32 %v1304, 1.442695
    %v1356 = vpow.pop %v1355
    %v1357 = vmul.f32 %v1305, 1.442695
    %v1358 = vpow.pop %v1357
    %v1359 = vmul.f32 %v1306, 1.442695
    %v1360 = vpow.pop %v1359
    %v1361 = vmul.f32 %v1307, 1.442695
    %v1362 = vpow.pop %v1361
    %v1363 = vmul.f32 %v1308, 1.442695
    %v1364 = vpow.pop %v1363
    %v1365 = vmul.f32 %v1309, 1.442695
    %v1366 = vpow.pop %v1365
    %v1367 = vmul.f32 %v1310, 1.442695
    %v1368 = vpow.pop %v1367
    %v1369 = vmul.f32 %v1311, 1.442695
    %v1370 = vpow.pop %v1369
    %v1371 = vmul.f32 %v1312, 1.442695
    %v1372 = vpow.pop %v1371
    %v1373 = vmul.f32 %v1313, 1.442695
    %v1374 = vpow.pop %v1373
    %v1375 = vmul.f32 %v1314, 1.442695
    %v1376 = vpow.pop %v1375
    %v1377 = vmul.f32 %v1315, 1.442695
    %v1378 = vpow.pop %v1377
    %v1379 = vmul.f32 %v1316, 1.442695
    %v1380 = vpow.pop %v1379
    %v1381 = vsub.f32 %v529, %v1206
    %v1382 = vsub.f32 %v531, %v1208
    %v1383 = vsub.f32 %v534, %v1211
    %v1384 = vsub.f32 %v536, %v1213
    %v1385 = vsub.f32 %v539, %v1216
    %v1386 = vsub.f32 %v541, %v1218
    %v1387 = vsub.f32 %v544, %v1221
    %v1388 = vsub.f32 %v546, %v1223
    %v1389 = vsub.f32 %v549, %v1226
    %v1390 = vsub.f32 %v551, %v1228
    %v1391 = vsub.f32 %v554, %v1231
    %v1392 = vsub.f32 %v556, %v1233
    %v1393 = vsub.f32 %v559, %v1236
    %v1394 = vsub.f32 %v561, %v1238
    %v1395 = vsub.f32 %v564, %v1241
    %v1396 = vsub.f32 %v566, %v1243
    %v1397 = vsub.f32 %v569, %v1246
    %v1398 = vsub.f32 %v571, %v1248
    %v1399 = vsub.f32 %v574, %v1251
    %v1400 = vsub.f32 %v576, %v1253
    %v1401 = vsub.f32 %v579, %v1256
    %v1402 = vsub.f32 %v581, %v1258
    %v1403 = vsub.f32 %v584, %v1261
    %v1404 = vsub.f32 %v586, %v1263
    %v1405 = vsub.f32 %v589, %v1266
    %v1406 = vsub.f32 %v591, %v1268
    %v1407 = vsub.f32 %v594, %v1271
    %v1408 = vsub.f32 %v596, %v1273
    %v1409 = vsub.f32 %v599, %v1276
    %v1410 = vsub.f32 %v601, %v1278
    %v1411 = vsub.f32 %v604, %v1281
    %v1412 = vsub.f32 %v606, %v1283
    %v1413 = vmul.f32 %v1381, %v1381
    %v1414 = vmul.f32 %v1382, %v1382
    %v1415 = vmul.f32 %v1383, %v1383
    %v1416 = vmul.f32 %v1384, %v1384
    %v1417 = vmul.f32 %v1385, %v1385
    %v1418 = vmul.f32 %v1386, %v1386
    %v1419 = vmul.f32 %v1387, %v1387
    %v1420 = vmul.f32 %v1388, %v1388
    %v1421 = vmul.f32 %v1389, %v1389
    %v1422 = vmul.f32 %v1390, %v1390
    %v1423 = vmul.f32 %v1391, %v1391
    %v1424 = vmul.f32 %v1392, %v1392
    %v1425 = vmul.f32 %v1393, %v1393
    %v1426 = vmul.f32 %v1394, %v1394
    %v1427 = vmul.f32 %v1395, %v1395
    %v1428 = vmul.f32 %v1396, %v1396
    %v1429 = vmul.f32 %v1397, %v1397
    %v1430 = vmul.f32 %v1398, %v1398
    %v1431 = vmul.f32 %v1399, %v1399
    %v1432 = vmul.f32 %v1400, %v1400
    %v1433 = vmul.f32 %v1401, %v1401
    %v1434 = vmul.f32 %v1402, %v1402
    %v1435 = vmul.f32 %v1403, %v1403
    %v1436 = vmul.f32 %v1404, %v1404
    %v1437 = vmul.f32 %v1405, %v1405
    %v1438 = vmul.f32 %v1406, %v1406
    %v1439 = vmul.f32 %v1407, %v1407
    %v1440 = vmul.f32 %v1408, %v1408
    %v1441 = vmul.f32 %v1409, %v1409
    %v1442 = vmul.f32 %v1410, %v1410
    %v1443 = vmul.f32 %v1411, %v1411
    %v1444 = vmul.f32 %v1412, %v1412
    %v1445 = vsub.f32 %v529, %v736
    %v1446 = vsub.f32 %v531, %v737
    %v1447 = vsub.f32 %v534, %v738
    %v1448 = vsub.f32 %v536, %v739
    %v1449 = vsub.f32 %v539, %v740
    %v1450 = vsub.f32 %v541, %v741
    %v1451 = vsub.f32 %v544, %v742
    %v1452 = vsub.f32 %v546, %v743
    %v1453 = vsub.f32 %v549, %v744
    %v1454 = vsub.f32 %v551, %v745
    %v1455 = vsub.f32 %v554, %v746
    %v1456 = vsub.f32 %v556, %v747
    %v1457 = vsub.f32 %v559, %v748
    %v1458 = vsub.f32 %v561, %v749
    %v1459 = vsub.f32 %v564, %v750
    %v1460 = vsub.f32 %v566, %v751
    %v1461 = vsub.f32 %v569, %v752
    %v1462 = vsub.f32 %v571, %v753
    %v1463 = vsub.f32 %v574, %v754
    %v1464 = vsub.f32 %v576, %v755
    %v1465 = vsub.f32 %v579, %v756
    %v1466 = vsub.f32 %v581, %v757
    %v1467 = vsub.f32 %v584, %v758
    %v1468 = vsub.f32 %v586, %v759
    %v1469 = vsub.f32 %v589, %v760
    %v1470 = vsub.f32 %v591, %v761
    %v1471 = vsub.f32 %v594, %v762
    %v1472 = vsub.f32 %v596, %v763
    %v1473 = vsub.f32 %v599, %v764
    %v1474 = vsub.f32 %v601, %v765
    %v1475 = vsub.f32 %v604, %v766
    %v1476 = vsub.f32 %v606, %v767
    %v1477 = vmul.f32 %v1445, %v1445
    %v1478 = vmul.f32 %v1446, %v1446
    %v1479 = vmul.f32 %v1447, %v1447
    %v1480 = vmul.f32 %v1448, %v1448
    %v1481 = vmul.f32 %v1449, %v1449
    %v1482 = vmul.f32 %v1450, %v1450
    %v1483 = vmul.f32 %v1451, %v1451
    %v1484 = vmul.f32 %v1452, %v1452
    %v1485 = vmul.f32 %v1453, %v1453
    %v1486 = vmul.f32 %v1454, %v1454
    %v1487 = vmul.f32 %v1455, %v1455
    %v1488 = vmul.f32 %v1456, %v1456
    %v1489 = vmul.f32 %v1457, %v1457
    %v1490 = vmul.f32 %v1458, %v1458
    %v1491 = vmul.f32 %v1459, %v1459
    %v1492 = vmul.f32 %v1460, %v1460
    %v1493 = vmul.f32 %v1461, %v1461
    %v1494 = vmul.f32 %v1462, %v1462
    %v1495 = vmul.f32 %v1463, %v1463
    %v1496 = vmul.f32 %v1464, %v1464
    %v1497 = vmul.f32 %v1465, %v1465
    %v1498 = vmul.f32 %v1466, %v1466
    %v1499 = vmul.f32 %v1467, %v1467
    %v1500 = vmul.f32 %v1468, %v1468
    %v1501 = vmul.f32 %v1469, %v1469
    %v1502 = vmul.f32 %v1470, %v1470
    %v1503 = vmul.f32 %v1471, %v1471
    %v1504 = vmul.f32 %v1472, %v1472
    %v1505 = vmul.f32 %v1473, %v1473
    %v1506 = vmul.f32 %v1474, %v1474
    %v1507 = vmul.f32 %v1475, %v1475
    %v1508 = vmul.f32 %v1476, %v1476
    %v1509 = vsub.f32 %v1413, %v1477
    %v1510 = vsub.f32 %v1414, %v1478
    %v1511 = vsub.f32 %v1415, %v1479
    %v1512 = vsub.f32 %v1416, %v1480
    %v1513 = vsub.f32 %v1417, %v1481
    %v1514 = vsub.f32 %v1418, %v1482
    %v1515 = vsub.f32 %v1419, %v1483
    %v1516 = vsub.f32 %v1420, %v1484
    %v1517 = vsub.f32 %v1421, %v1485
    %v1518 = vsub.f32 %v1422, %v1486
    %v1519 = vsub.f32 %v1423, %v1487
    %v1520 = vsub.f32 %v1424, %v1488
    %v1521 = vsub.f32 %v1425, %v1489
    %v1522 = vsub.f32 %v1426, %v1490
    %v1523 = vsub.f32 %v1427, %v1491
    %v1524 = vsub.f32 %v1428, %v1492
    %v1525 = vsub.f32 %v1429, %v1493
    %v1526 = vsub.f32 %v1430, %v1494
    %v1527 = vsub.f32 %v1431, %v1495
    %v1528 = vsub.f32 %v1432, %v1496
    %v1529 = vsub.f32 %v1433, %v1497
    %v1530 = vsub.f32 %v1434, %v1498
    %v1531 = vsub.f32 %v1435, %v1499
    %v1532 = vsub.f32 %v1436, %v1500
    %v1533 = vsub.f32 %v1437, %v1501
    %v1534 = vsub.f32 %v1438, %v1502
    %v1535 = vsub.f32 %v1439, %v1503
    %v1536 = vsub.f32 %v1440, %v1504
    %v1537 = vsub.f32 %v1441, %v1505
    %v1538 = vsub.f32 %v1442, %v1506
    %v1539 = vsub.f32 %v1443, %v1507
    %v1540 = vsub.f32 %v1444, %v1508
    %v1541 = vmul.f32 %v1509, %v1318
    %v1542 = vmul.f32 %v1510, %v1320
    %v1543 = vmul.f32 %v1511, %v1322
    %v1544 = vmul.f32 %v1512, %v1324
    %v1545 = vmul.f32 %v1513, %v1326
    %v1546 = vmul.f32 %v1514, %v1328
    %v1547 = vmul.f32 %v1515, %v1330
    %v1548 = vmul.f32 %v1516, %v1332
    %v1549 = vmul.f32 %v1517, %v1334
    %v1550 = vmul.f32 %v1518, %v1336
    %v1551 = vmul.f32 %v1519, %v1338
    %v1552 = vmul.f32 %v1520, %v1340
    %v1553 = vmul.f32 %v1521, %v1342
    %v1554 = vmul.f32 %v1522, %v1344
    %v1555 = vmul.f32 %v1523, %v1346
    %v1556 = vmul.f32 %v1524, %v1348
    %v1557 = vmul.f32 %v1525, %v1350
    %v1558 = vmul.f32 %v1526, %v1352
    %v1559 = vmul.f32 %v1527, %v1354
    %v1560 = vmul.f32 %v1528, %v1356
    %v1561 = vmul.f32 %v1529, %v1358
    %v1562 = vmul.f32 %v1530, %v1360
    %v1563 = vmul.f32 %v1531, %v1362
    %v1564 = vmul.f32 %v1532, %v1364
    %v1565 = vmul.f32 %v1533, %v1366
    %v1566 = vmul.f32 %v1534, %v1368
    %v1567 = vmul.f32 %v1535, %v1370
    %v1568 = vmul.f32 %v1536, %v1372
    %v1569 = vmul.f32 %v1537, %v1374
    %v1570 = vmul.f32 %v1538, %v1376
    %v1571 = vmul.f32 %v1539, %v1378
    %v1572 = vmul.f32 %v1540, %v1380
    %v1573 = vsel %vm248, %v1541, 0.0
    %1574 = vadd.xlane.f32.xlu0 %v1573
    %v1575 = vpop.xlane.xlu0 %1574
    %v1576 = vsel %vm248, %v1542, 0.0
    %1577 = vadd.xlane.f32.xlu0 %v1576
    %v1578 = vpop.xlane.xlu0 %1577
    %v1579 = vsel %vm248, %v1543, 0.0
    %1580 = vadd.xlane.f32.xlu0 %v1579
    %v1581 = vpop.xlane.xlu0 %1580
    %v1582 = vsel %vm248, %v1544, 0.0
    %1583 = vadd.xlane.f32.xlu0 %v1582
    %v1584 = vpop.xlane.xlu0 %1583
    %v1585 = vsel %vm248, %v1545, 0.0
    %1586 = vadd.xlane.f32.xlu0 %v1585
    %v1587 = vpop.xlane.xlu0 %1586
    %v1588 = vsel %vm248, %v1546, 0.0
    %1589 = vadd.xlane.f32.xlu0 %v1588
    %v1590 = vpop.xlane.xlu0 %1589
    %v1591 = vsel %vm248, %v1547, 0.0
    %1592 = vadd.xlane.f32.xlu0 %v1591
    %v1593 = vpop.xlane.xlu0 %1592
    %v1594 = vsel %vm248, %v1548, 0.0
    %1595 = vadd.xlane.f32.xlu0 %v1594
    %v1596 = vpop.xlane.xlu0 %1595
    %v1597 = vsel %vm248, %v1549, 0.0
    %1598 = vadd.xlane.f32.xlu0 %v1597
    %v1599 = vpop.xlane.xlu0 %1598
    %v1600 = vsel %vm248, %v1550, 0.0
    %1601 = vadd.xlane.f32.xlu0 %v1600
    %v1602 = vpop.xlane.xlu0 %1601
    %v1603 = vsel %vm248, %v1551, 0.0
    %1604 = vadd.xlane.f32.xlu0 %v1603
    %v1605 = vpop.xlane.xlu0 %1604
    %v1606 = vsel %vm248, %v1552, 0.0
    %1607 = vadd.xlane.f32.xlu0 %v1606
    %v1608 = vpop.xlane.xlu0 %1607
    %v1609 = vsel %vm248, %v1553, 0.0
    %1610 = vadd.xlane.f32.xlu0 %v1609
    %v1611 = vpop.xlane.xlu0 %1610
    %v1612 = vsel %vm248, %v1554, 0.0
    %1613 = vadd.xlane.f32.xlu0 %v1612
    %v1614 = vpop.xlane.xlu0 %1613
    %v1615 = vsel %vm248, %v1555, 0.0
    %1616 = vadd.xlane.f32.xlu0 %v1615
    %v1617 = vpop.xlane.xlu0 %1616
    %v1618 = vsel %vm248, %v1556, 0.0
    %1619 = vadd.xlane.f32.xlu0 %v1618
    %v1620 = vpop.xlane.xlu0 %1619
    %v1621 = vsel %vm248, %v1557, 0.0
    %1622 = vadd.xlane.f32.xlu0 %v1621
    %v1623 = vpop.xlane.xlu0 %1622
    %v1624 = vsel %vm248, %v1558, 0.0
    %1625 = vadd.xlane.f32.xlu0 %v1624
    %v1626 = vpop.xlane.xlu0 %1625
    %v1627 = vsel %vm248, %v1559, 0.0
    %1628 = vadd.xlane.f32.xlu0 %v1627
    %v1629 = vpop.xlane.xlu0 %1628
    %v1630 = vsel %vm248, %v1560, 0.0
    %1631 = vadd.xlane.f32.xlu0 %v1630
    %v1632 = vpop.xlane.xlu0 %1631
    %v1633 = vsel %vm248, %v1561, 0.0
    %1634 = vadd.xlane.f32.xlu0 %v1633
    %v1635 = vpop.xlane.xlu0 %1634
    %v1636 = vsel %vm248, %v1562, 0.0
    %1637 = vadd.xlane.f32.xlu0 %v1636
    %v1638 = vpop.xlane.xlu0 %1637
    %v1639 = vsel %vm248, %v1563, 0.0
    %1640 = vadd.xlane.f32.xlu0 %v1639
    %v1641 = vpop.xlane.xlu0 %1640
    %v1642 = vsel %vm248, %v1564, 0.0
    %1643 = vadd.xlane.f32.xlu0 %v1642
    %v1644 = vpop.xlane.xlu0 %1643
    %v1645 = vsel %vm248, %v1565, 0.0
    %1646 = vadd.xlane.f32.xlu0 %v1645
    %v1647 = vpop.xlane.xlu0 %1646
    %v1648 = vsel %vm248, %v1566, 0.0
    %1649 = vadd.xlane.f32.xlu0 %v1648
    %v1650 = vpop.xlane.xlu0 %1649
    %v1651 = vsel %vm248, %v1567, 0.0
    %1652 = vadd.xlane.f32.xlu0 %v1651
    %v1653 = vpop.xlane.xlu0 %1652
    %v1654 = vsel %vm248, %v1568, 0.0
    %1655 = vadd.xlane.f32.xlu0 %v1654
    %v1656 = vpop.xlane.xlu0 %1655
    %v1657 = vsel %vm248, %v1569, 0.0
    %1658 = vadd.xlane.f32.xlu0 %v1657
    %v1659 = vpop.xlane.xlu0 %1658
    %v1660 = vsel %vm248, %v1570, 0.0
    %1661 = vadd.xlane.f32.xlu0 %v1660
    %v1662 = vpop.xlane.xlu0 %1661
    %v1663 = vsel %vm248, %v1571, 0.0
    %1664 = vadd.xlane.f32.xlu0 %v1663
    %v1665 = vpop.xlane.xlu0 %1664
    %v1666 = vsel %vm248, %v1572, 0.0
    %1667 = vadd.xlane.f32.xlu0 %v1666
    %v1668 = vpop.xlane.xlu0 %1667
    %v1669 = vld [vmem:[#allocation2] sm:$0xff]
    %v1670 = vld [vmem:[#allocation2 + $0x8] sm:$0xff]
    %v1671 = vld [vmem:[#allocation2 + $0x10] sm:$0xff]
    %v1672 = vld [vmem:[#allocation2 + $0x18] sm:$0xff]
    %v1673 = vld [vmem:[#allocation2 + $0x20] sm:$0xff]
    %v1674 = vld [vmem:[#allocation2 + $0x28] sm:$0xff]
    %v1675 = vld [vmem:[#allocation2 + $0x30] sm:$0xff]
    %v1676 = vld [vmem:[#allocation2 + $0x38] sm:$0xff]
    %v1677 = vld [vmem:[#allocation2 + $0x40] sm:$0xff]
    %v1678 = vld [vmem:[#allocation2 + $0x48] sm:$0xff]
    %v1679 = vld [vmem:[#allocation2 + $0x50] sm:$0xff]
    %v1680 = vld [vmem:[#allocation2 + $0x58] sm:$0xff]
    %v1681 = vld [vmem:[#allocation2 + $0x60] sm:$0xff]
    %v1682 = vld [vmem:[#allocation2 + $0x68] sm:$0xff]
    %v1683 = vld [vmem:[#allocation2 + $0x70] sm:$0xff]
    %v1684 = vld [vmem:[#allocation2 + $0x78] sm:$0xff]
    %v1685 = vld [vmem:[#allocation2 + $0x80] sm:$0xff]
    %v1686 = vld [vmem:[#allocation2 + $0x88] sm:$0xff]
    %v1687 = vld [vmem:[#allocation2 + $0x90] sm:$0xff]
    %v1688 = vld [vmem:[#allocation2 + $0x98] sm:$0xff]
    %v1689 = vld [vmem:[#allocation2 + $0xa0] sm:$0xff]
    %v1690 = vld [vmem:[#allocation2 + $0xa8] sm:$0xff]
    %v1691 = vld [vmem:[#allocation2 + $0xb0] sm:$0xff]
    %v1692 = vld [vmem:[#allocation2 + $0xb8] sm:$0xff]
    %v1693 = vld [vmem:[#allocation2 + $0xc0] sm:$0xff]
    %v1694 = vld [vmem:[#allocation2 + $0xc8] sm:$0xff]
    %v1695 = vld [vmem:[#allocation2 + $0xd0] sm:$0xff]
    %v1696 = vld [vmem:[#allocation2 + $0xd8] sm:$0xff]
    %v1697 = vld [vmem:[#allocation2 + $0xe0] sm:$0xff]
    %v1698 = vld [vmem:[#allocation2 + $0xe8] sm:$0xff]
    %v1699 = vld [vmem:[#allocation2 + $0xf0] sm:$0xff]
    %v1700 = vld [vmem:[#allocation2 + $0xf8] sm:$0xff]
    %v1701 = vand.u32 2147483647, %v1575
    %v1702 = vand.u32 2147483647, %v1578
    %v1703 = vand.u32 2147483647, %v1581
    %v1704 = vand.u32 2147483647, %v1584
    %v1705 = vand.u32 2147483647, %v1587
    %v1706 = vand.u32 2147483647, %v1590
    %v1707 = vand.u32 2147483647, %v1593
    %v1708 = vand.u32 2147483647, %v1596
    %v1709 = vand.u32 2147483647, %v1599
    %v1710 = vand.u32 2147483647, %v1602
    %v1711 = vand.u32 2147483647, %v1605
    %v1712 = vand.u32 2147483647, %v1608
    %v1713 = vand.u32 2147483647, %v1611
    %v1714 = vand.u32 2147483647, %v1614
    %v1715 = vand.u32 2147483647, %v1617
    %v1716 = vand.u32 2147483647, %v1620
    %v1717 = vand.u32 2147483647, %v1623
    %v1718 = vand.u32 2147483647, %v1626
    %v1719 = vand.u32 2147483647, %v1629
    %v1720 = vand.u32 2147483647, %v1632
    %v1721 = vand.u32 2147483647, %v1635
    %v1722 = vand.u32 2147483647, %v1638
    %v1723 = vand.u32 2147483647, %v1641
    %v1724 = vand.u32 2147483647, %v1644
    %v1725 = vand.u32 2147483647, %v1647
    %v1726 = vand.u32 2147483647, %v1650
    %v1727 = vand.u32 2147483647, %v1653
    %v1728 = vand.u32 2147483647, %v1656
    %v1729 = vand.u32 2147483647, %v1659
    %v1730 = vand.u32 2147483647, %v1662
    %v1731 = vand.u32 2147483647, %v1665
    %v1732 = vand.u32 2147483647, %v1668
    %v1733 = vadd.f32 %v1669, %v1701
    %v1734 = vadd.f32 %v1670, %v1702
    %v1735 = vadd.f32 %v1671, %v1703
    %v1736 = vadd.f32 %v1672, %v1704
    %v1737 = vadd.f32 %v1673, %v1705
    %v1738 = vadd.f32 %v1674, %v1706
    %v1739 = vadd.f32 %v1675, %v1707
    %v1740 = vadd.f32 %v1676, %v1708
    %v1741 = vadd.f32 %v1677, %v1709
    %v1742 = vadd.f32 %v1678, %v1710
    %v1743 = vadd.f32 %v1679, %v1711
    %v1744 = vadd.f32 %v1680, %v1712
    %v1745 = vadd.f32 %v1681, %v1713
    %v1746 = vadd.f32 %v1682, %v1714
    %v1747 = vadd.f32 %v1683, %v1715
    %v1748 = vadd.f32 %v1684, %v1716
    %v1749 = vadd.f32 %v1685, %v1717
    %v1750 = vadd.f32 %v1686, %v1718
    %v1751 = vadd.f32 %v1687, %v1719
    %v1752 = vadd.f32 %v1688, %v1720
    %v1753 = vadd.f32 %v1689, %v1721
    %v1754 = vadd.f32 %v1690, %v1722
    %v1755 = vadd.f32 %v1691, %v1723
    %v1756 = vadd.f32 %v1692, %v1724
    %v1757 = vadd.f32 %v1693, %v1725
    %v1758 = vadd.f32 %v1694, %v1726
    %v1759 = vadd.f32 %v1695, %v1727
    %v1760 = vadd.f32 %v1696, %v1728
    %v1761 = vadd.f32 %v1697, %v1729
    %v1762 = vadd.f32 %v1698, %v1730
    %v1763 = vadd.f32 %v1699, %v1731
    %v1764 = vadd.f32 %v1700, %v1732
    %vm1765 = vcmask 7168
    %1766 = vst.msk [vmem:[#allocation2] sm:$0xff] %vm1765, %v1733
    %1767 = vst.msk [vmem:[#allocation2 + $0x8] sm:$0xff] %vm1765, %v1734
    %1768 = vst.msk [vmem:[#allocation2 + $0x10] sm:$0xff] %vm1765, %v1735
    %1769 = vst.msk [vmem:[#allocation2 + $0x18] sm:$0xff] %vm1765, %v1736
    %1770 = vst.msk [vmem:[#allocation2 + $0x20] sm:$0xff] %vm1765, %v1737
    %1771 = vst.msk [vmem:[#allocation2 + $0x28] sm:$0xff] %vm1765, %v1738
    %1772 = vst.msk [vmem:[#allocation2 + $0x30] sm:$0xff] %vm1765, %v1739
    %1773 = vst.msk [vmem:[#allocation2 + $0x38] sm:$0xff] %vm1765, %v1740
    %1774 = vst.msk [vmem:[#allocation2 + $0x40] sm:$0xff] %vm1765, %v1741
    %1775 = vst.msk [vmem:[#allocation2 + $0x48] sm:$0xff] %vm1765, %v1742
    %1776 = vst.msk [vmem:[#allocation2 + $0x50] sm:$0xff] %vm1765, %v1743
    %1777 = vst.msk [vmem:[#allocation2 + $0x58] sm:$0xff] %vm1765, %v1744
    %1778 = vst.msk [vmem:[#allocation2 + $0x60] sm:$0xff] %vm1765, %v1745
    %1779 = vst.msk [vmem:[#allocation2 + $0x68] sm:$0xff] %vm1765, %v1746
    %1780 = vst.msk [vmem:[#allocation2 + $0x70] sm:$0xff] %vm1765, %v1747
    %1781 = vst.msk [vmem:[#allocation2 + $0x78] sm:$0xff] %vm1765, %v1748
    %1782 = vst.msk [vmem:[#allocation2 + $0x80] sm:$0xff] %vm1765, %v1749
    %1783 = vst.msk [vmem:[#allocation2 + $0x88] sm:$0xff] %vm1765, %v1750
    %1784 = vst.msk [vmem:[#allocation2 + $0x90] sm:$0xff] %vm1765, %v1751
    %1785 = vst.msk [vmem:[#allocation2 + $0x98] sm:$0xff] %vm1765, %v1752
    %1786 = vst.msk [vmem:[#allocation2 + $0xa0] sm:$0xff] %vm1765, %v1753
    %1787 = vst.msk [vmem:[#allocation2 + $0xa8] sm:$0xff] %vm1765, %v1754
    %1788 = vst.msk [vmem:[#allocation2 + $0xb0] sm:$0xff] %vm1765, %v1755
    %1789 = vst.msk [vmem:[#allocation2 + $0xb8] sm:$0xff] %vm1765, %v1756
    %1790 = vst.msk [vmem:[#allocation2 + $0xc0] sm:$0xff] %vm1765, %v1757
    %1791 = vst.msk [vmem:[#allocation2 + $0xc8] sm:$0xff] %vm1765, %v1758
    %1792 = vst.msk [vmem:[#allocation2 + $0xd0] sm:$0xff] %vm1765, %v1759
    %1793 = vst.msk [vmem:[#allocation2 + $0xd8] sm:$0xff] %vm1765, %v1760
    %1794 = vst.msk [vmem:[#allocation2 + $0xe0] sm:$0xff] %vm1765, %v1761
    %1795 = vst.msk [vmem:[#allocation2 + $0xe8] sm:$0xff] %vm1765, %v1762
    %1796 = vst.msk [vmem:[#allocation2 + $0xf0] sm:$0xff] %vm1765, %v1763
    %1797 = vst.msk [vmem:[#allocation2 + $0xf8] sm:$0xff] %vm1765, %v1764
    // Predicated region
    $region42: #{tpu_custom_call.1} parent=1 // pred_check
      %p1798 = pneg %p78
    $region43: #{tpu_custom_call.1} parent=1 // pred_check_branch
      %1800 = sbr.rel (%p1798) target = $region45
    $region44: #{tpu_custom_call.1} parent=1 // pred_region
      %v1801 = vld [vmem:[#allocation2] sm:$0xff]
      %v1802 = vld [vmem:[#allocation2 + $0x8] sm:$0xff]
      %v1803 = vld [vmem:[#allocation2 + $0x10] sm:$0xff]
      %v1804 = vld [vmem:[#allocation2 + $0x18] sm:$0xff]
      %v1805 = vld [vmem:[#allocation2 + $0x20] sm:$0xff]
      %v1806 = vld [vmem:[#allocation2 + $0x28] sm:$0xff]
      %v1807 = vld [vmem:[#allocation2 + $0x30] sm:$0xff]
      %v1808 = vld [vmem:[#allocation2 + $0x38] sm:$0xff]
      %v1809 = vld [vmem:[#allocation2 + $0x40] sm:$0xff]
      %v1810 = vld [vmem:[#allocation2 + $0x48] sm:$0xff]
      %v1811 = vld [vmem:[#allocation2 + $0x50] sm:$0xff]
      %v1812 = vld [vmem:[#allocation2 + $0x58] sm:$0xff]
      %v1813 = vld [vmem:[#allocation2 + $0x60] sm:$0xff]
      %v1814 = vld [vmem:[#allocation2 + $0x68] sm:$0xff]
      %v1815 = vld [vmem:[#allocation2 + $0x70] sm:$0xff]
      %v1816 = vld [vmem:[#allocation2 + $0x78] sm:$0xff]
      %v1817 = vld [vmem:[#allocation2 + $0x80] sm:$0xff]
      %v1818 = vld [vmem:[#allocation2 + $0x88] sm:$0xff]
      %v1819 = vld [vmem:[#allocation2 + $0x90] sm:$0xff]
      %v1820 = vld [vmem:[#allocation2 + $0x98] sm:$0xff]
      %v1821 = vld [vmem:[#allocation2 + $0xa0] sm:$0xff]
      %v1822 = vld [vmem:[#allocation2 + $0xa8] sm:$0xff]
      %v1823 = vld [vmem:[#allocation2 + $0xb0] sm:$0xff]
      %v1824 = vld [vmem:[#allocation2 + $0xb8] sm:$0xff]
      %v1825 = vld [vmem:[#allocation2 + $0xc0] sm:$0xff]
      %v1826 = vld [vmem:[#allocation2 + $0xc8] sm:$0xff]
      %v1827 = vld [vmem:[#allocation2 + $0xd0] sm:$0xff]
      %v1828 = vld [vmem:[#allocation2 + $0xd8] sm:$0xff]
      %v1829 = vld [vmem:[#allocation2 + $0xe0] sm:$0xff]
      %v1830 = vld [vmem:[#allocation2 + $0xe8] sm:$0xff]
      %v1831 = vld [vmem:[#allocation2 + $0xf0] sm:$0xff]
      %v1832 = vld [vmem:[#allocation2 + $0xf8] sm:$0xff]
      %v1833 = vsel %vm1765, %v1801, 0.0
      %v1834 = vsel %vm1765, %v1802, 0.0
      %v1835 = vadd.f32 %v1833, %v1834
      %v1836 = vsel %vm1765, %v1803, 0.0
      %v1837 = vadd.f32 %v1835, %v1836
      %v1838 = vsel %vm1765, %v1804, 0.0
      %v1839 = vadd.f32 %v1837, %v1838
      %v1840 = vsel %vm1765, %v1805, 0.0
      %v1841 = vadd.f32 %v1839, %v1840
      %v1842 = vsel %vm1765, %v1806, 0.0
      %v1843 = vadd.f32 %v1841, %v1842
      %v1844 = vsel %vm1765, %v1807, 0.0
      %v1845 = vadd.f32 %v1843, %v1844
      %v1846 = vsel %vm1765, %v1808, 0.0
      %v1847 = vadd.f32 %v1845, %v1846
      %v1848 = vsel %vm1765, %v1809, 0.0
      %v1849 = vadd.f32 %v1847, %v1848
      %v1850 = vsel %vm1765, %v1810, 0.0
      %v1851 = vadd.f32 %v1849, %v1850
      %v1852 = vsel %vm1765, %v1811, 0.0
      %v1853 = vadd.f32 %v1851, %v1852
      %v1854 = vsel %vm1765, %v1812, 0.0
      %v1855 = vadd.f32 %v1853, %v1854
      %v1856 = vsel %vm1765, %v1813, 0.0
      %v1857 = vadd.f32 %v1855, %v1856
      %v1858 = vsel %vm1765, %v1814, 0.0
      %v1859 = vadd.f32 %v1857, %v1858
      %v1860 = vsel %vm1765, %v1815, 0.0
      %v1861 = vadd.f32 %v1859, %v1860
      %v1862 = vsel %vm1765, %v1816, 0.0
      %v1863 = vadd.f32 %v1861, %v1862
      %v1864 = vsel %vm1765, %v1817, 0.0
      %v1865 = vadd.f32 %v1863, %v1864
      %v1866 = vsel %vm1765, %v1818, 0.0
      %v1867 = vadd.f32 %v1865, %v1866
      %v1868 = vsel %vm1765, %v1819, 0.0
      %v1869 = vadd.f32 %v1867, %v1868
      %v1870 = vsel %vm1765, %v1820, 0.0
      %v1871 = vadd.f32 %v1869, %v1870
      %v1872 = vsel %vm1765, %v1821, 0.0
      %v1873 = vadd.f32 %v1871, %v1872
      %v1874 = vsel %vm1765, %v1822, 0.0
      %v1875 = vadd.f32 %v1873, %v1874
      %v1876 = vsel %vm1765, %v1823, 0.0
      %v1877 = vadd.f32 %v1875, %v1876
      %v1878 = vsel %vm1765, %v1824, 0.0
      %v1879 = vadd.f32 %v1877, %v1878
      %v1880 = vsel %vm1765, %v1825, 0.0
      %v1881 = vadd.f32 %v1879, %v1880
      %v1882 = vsel %vm1765, %v1826, 0.0
      %v1883 = vadd.f32 %v1881, %v1882
      %v1884 = vsel %vm1765, %v1827, 0.0
      %v1885 = vadd.f32 %v1883, %v1884
      %v1886 = vsel %vm1765, %v1828, 0.0
      %v1887 = vadd.f32 %v1885, %v1886
      %v1888 = vsel %vm1765, %v1829, 0.0
      %v1889 = vadd.f32 %v1887, %v1888
      %v1890 = vsel %vm1765, %v1830, 0.0
      %v1891 = vadd.f32 %v1889, %v1890
      %v1892 = vsel %vm1765, %v1831, 0.0
      %v1893 = vadd.f32 %v1891, %v1892
      %v1894 = vsel %vm1765, %v1832, 0.0
      %v1895 = vadd.f32 %v1893, %v1894
      %v1896 = vrot.slane %v1895, 4
      %v1897 = vadd.f32 %v1895, %v1896
      %v1898 = vrot.slane %v1897, 2
      %v1899 = vadd.f32 %v1897, %v1898
      %v1900 = vrot.slane %v1899, 1
      %v1901 = vadd.f32 %v1899, %v1900
      %1903 = vset.pattern.permute.xlu0 0
      %1904 = vperm.xlu0 %1903, %v1901
      %v1905 = vpop.permute.xlu0 %1904
      %1907 = vst [vmem:[#allocation3] sm:$0x1] %v1905
    $region45: #{tpu_custom_call.1} parent=1 // pred_fallthru
      _
    // Predicated region
    $region46: #{tpu_custom_call.1} parent=1 // pred_check
      _
    $region47: #{tpu_custom_call.1} parent=1 // pred_check_branch
      %1909 = sbr.rel (0) target = $region49
    $region48: #{tpu_custom_call.1} parent=1 // pred_region
      %1911 = vsyncadd [#allocation4], 0
      %s1913 = sshll.u32 [#allocation3], 4
      %s1914 = int_to_ptr.vmem [resolvable:$true] %s1913
      %s1915 = sshll.u32 %s9, 4
      %s1916 = int_to_ptr.hbm [resolvable:$true] %s1915
      %1918 = dma.vmem_to_hbm [thread:$0]  %s1914, 16, %s1916, [#allocation4]
    $region49: #{tpu_custom_call.1} parent=1 // pred_fallthru
      _
    // Predicated region
    $region50: #{tpu_custom_call.1} parent=1 // pred_check
      _
    $region51: #{tpu_custom_call.1} parent=1 // pred_check_branch
      %1920 = sbr.rel (0) target = $region53
    $region52: #{tpu_custom_call.1} parent=1 // pred_region
      %1922 = dma.done [#allocation4], 16
    $region53: #{tpu_custom_call.1} parent=1 // pred_fallthru
      _
    %1923 = vsyncpa [#allocation4], 1

</llo_original>
